<compile_context>
chip_gen: v7x
topology: tpu7x:2x2x1
jax: 0.10.0
libtpu: 0.0.40
codegen_flags: <defaults>
</compile_context>

<pallas_src>
import jax
import jax.numpy as jnp
from jax.experimental import pallas as pl
from jax.experimental.pallas import tpu as pltpu

VMEM_SPEC = pl.BlockSpec(memory_space=pltpu.MemorySpace.VMEM)


# ---------------------------------------------------------------------------
# Fused kernel
# ---------------------------------------------------------------------------
def _make_fused_kernel(n_nodes, e_members, num_layers, eps_list):
    """Builds the fused forward kernel; layer count / eps / residual flags static."""

    def kernel(*refs):
        (ens_ref, x_ref, eattr_ref, gsrc_ref, sdst_ref,
         dw1, db1, dw2, db2, dw3, db3, dw4, db4,
         rwx, rwe, rb) = refs[:16]
        gine = refs[16:16 + 6 * num_layers]
        base = 16 + 6 * num_layers
        aw, ab = refs[base], refs[base + 1]
        out_ref = refs[-1]

        f32 = jnp.float32

        # ---------------- DeepSetEncoder ----------------
        ens = ens_ref[...]                                                # [N*E, C]
        h = jnp.dot(ens, dw1[...], preferred_element_type=f32) + db1[...]
        h = jnp.maximum(h, 0.0)
        # second phi Linear WITHOUT bias; bias folded after the member sum
        h = jnp.dot(h, dw2[...], preferred_element_type=f32)              # [N*E, H]
        hid = h.shape[-1]
        # sum over ensemble members: reshape + reduce (no sum-matrix matmul)
        agg = (jnp.sum(h.reshape(n_nodes, e_members, hid), axis=1)
               + float(e_members) * db2[...])                             # [N, H]
        r = jnp.dot(agg, dw3[...], preferred_element_type=f32) + db3[...]
        r = jnp.maximum(r, 0.0)
        emb = jnp.dot(r, dw4[...], preferred_element_type=f32) + db4[...] # [N, H]

        # ---------------- dim_red (concat folded into split weights) ----
        x = x_ref[...]                                                    # [N, C]
        h = (jnp.dot(x, rwx[...], preferred_element_type=f32)
             + jnp.dot(emb, rwe[...], preferred_element_type=f32)
             + rb[...])                                                   # [N, H]

        # ---------------- ResGnn / GINEConv stack ------------------------
        eattr = eattr_ref[...]                                            # [Ee, 1]
        gsrc = gsrc_ref[...]                                              # [Ee, N]
        sdst = sdst_ref[...]                                              # [N, Ee]
        for l in range(num_layers):
            we, be, wm1, bm1, wm2, bm2 = gine[6 * l:6 * (l + 1)]
            e_emb = eattr * we[...] + be[...]                             # [Ee, H]
            xj = jnp.dot(gsrc, h, preferred_element_type=f32)             # gather x_j
            msg = jnp.maximum(xj + e_emb, 0.0)                            # relu(x_j + e)
            aggr = jnp.dot(sdst, msg, preferred_element_type=f32)         # scatter-add
            z = (1.0 + eps_list[l]) * h + aggr
            # GINE mlp: Linear (BN folded) -> ReLU -> Linear
            z = jnp.dot(z, wm1[...], preferred_element_type=f32) + bm1[...]
            z = jnp.maximum(z, 0.0)
            z = jnp.dot(z, wm2[...], preferred_element_type=f32) + bm2[...]
            z = jnp.maximum(z, 0.0)                                       # outer ReLU
            h = z if l == 0 else h + z                                    # residual (static)

        # ---------------- aggr head ---------------------------------------
        out_ref[...] = jnp.dot(h, aw[...], preferred_element_type=f32) + ab[...]

    return kernel


# ---------------------------------------------------------------------------
# Wrapper
# ---------------------------------------------------------------------------
def gnn_forward(ens, x, edge_src, edge_dst, eattr, params):
    """Full GNN.forward (loss='NormalCRPS' -> out_channels=2), one pallas_call."""
    n, e_mem, c = ens.shape
    num_layers = len(params['gine'])
    out_ch = params['aggr']['w'].shape[1]

    ens2d = ens.reshape(n * e_mem, c).astype(jnp.float32)
    # dense gather / scatter matrices (static graph; built once per forward)
    gsrc = jax.nn.one_hot(edge_src, n, dtype=jnp.float32)                 # [Ee, N]
    sdst = jax.nn.one_hot(edge_dst, n, dtype=jnp.float32).T               # [N, Ee]

    dp = params['deepset']
    dr = params['dim_red']
    rw_x = dr['w'][:c]                     # dim_red weight split: x part
    rw_e = dr['w'][c:]                     #                       emb part
    rb = dr['b']

    eps_list = []
    gine_args = []
    for lp in params['gine']:
        # fold eval-mode BatchNorm affine into the first MLP Linear
        wm1f = lp['wm1'] * lp['bn_a']
        bm1f = lp['bm1'] * lp['bn_a'] + lp['bn_c']
        gine_args += [lp['we'], lp['be'], wm1f, bm1f, lp['wm2'], lp['bm2']]
        eps_list.append(float(lp['eps']))

    args = ([ens2d, x.astype(jnp.float32), eattr.astype(jnp.float32), gsrc, sdst,
             dp['w1'], dp['b1'], dp['w2'], dp['b2'],
             dp['w3'], dp['b3'], dp['w4'], dp['b4'],
             rw_x, rw_e, rb]
            + gine_args
            + [params['aggr']['w'], params['aggr']['b']])

    kernel = _make_fused_kernel(n, e_mem, num_layers, tuple(eps_list))
    return pl.pallas_call(
        kernel,
        out_shape=jax.ShapeDtypeStruct((n, out_ch), jnp.float32),
        in_specs=[VMEM_SPEC] * len(args),
        out_specs=VMEM_SPEC,
    )(*args)


# ---------------------------------------------------------------------------
# Pure-JAX reference (unfolded BN, explicit concat, segment_sum) for validation
# ---------------------------------------------------------------------------
def reference_forward(ens, x, edge_src, edge_dst, eattr, params):
    p = params['deepset']
    h = jnp.maximum(ens @ p['w1'] + p['b1'], 0.0)
    h = h @ p['w2'] + p['b2']
    agg = h.sum(axis=1)
    r = jnp.maximum(agg @ p['w3'] + p['b3'], 0.0)
    emb = r @ p['w4'] + p['b4']
    nf = jnp.concatenate([x, emb], axis=1)
    h = nf @ params['dim_red']['w'] + params['dim_red']['b']
    n = x.shape[0]
    for i, lp in enumerate(params['gine']):
        e_emb = eattr * lp['we'] + lp['be']
        msg = jnp.maximum(h[edge_src] + e_emb, 0.0)
        aggr = jax.ops.segment_sum(msg, edge_dst, num_segments=n)
        z = (1.0 + lp['eps']) * h + aggr
        z = z @ lp['wm1'] + lp['bm1']
        z = z * lp['bn_a'] + lp['bn_c']
        z = jnp.maximum(z, 0.0)
        z = z @ lp['wm2'] + lp['bm2']
        z = jnp.maximum(z, 0.0)
        h = z if i == 0 else h + z
    return h @ params['aggr']['w'] + params['aggr']['b']


# ---------------------------------------------------------------------------
# Deterministic parameter construction
# ---------------------------------------------------------------------------
def _init_linear(key, fan_in, fan_out):
    w = jax.random.normal(key, (fan_in, fan_out), dtype=jnp.float32) * 0.1
    b = jnp.zeros((1, fan_out), dtype=jnp.float32)
    return w, b


def make_params(key, c_in, hidden, num_layers, out_ch):
    keys = jax.random.split(key, 16)
    dp = {}
    dp['w1'], dp['b1'] = _init_linear(keys[0], c_in, hidden)
    dp['w2'], dp['b2'] = _init_linear(keys[1], hidden, hidden)
    dp['w3'], dp['b3'] = _init_linear(keys[2], hidden, hidden)
    dp['w4'], dp['b4'] = _init_linear(keys[3], hidden, hidden)

    drw, drb = _init_linear(keys[4], c_in + hidden, hidden)

    bn_eps = 1e-5
    gine = []
    for l in range(num_layers):
        k = jax.random.split(keys[5 + l], 3)
        we, be = _init_linear(k[0], 1, hidden)        # GINEConv edge Linear(1, H)
        wm1, bm1 = _init_linear(k[1], hidden, hidden)
        wm2, bm2 = _init_linear(k[2], hidden, hidden)
        gine.append(dict(
            we=we, be=be, eps=0.0,                    # train_eps=True -> eps init 0
            wm1=wm1, bm1=bm1,
            # BatchNorm1d eval mode (fresh model: mean=0, var=1, gamma=1, beta=0);
            # trained running stats fold into bn_a/bn_c the same way.
            bn_a=jnp.full((1, hidden), 1.0 / jnp.sqrt(1.0 + bn_eps), jnp.float32),
            bn_c=jnp.zeros((1, hidden), jnp.float32),
            wm2=wm2, bm2=bm2,
        ))

    aw, ab = _init_linear(keys[12], hidden, out_ch)
    return dict(deepset=dp, dim_red=dict(w=drw, b=drb),
                gine=gine, aggr=dict(w=aw, b=ab))


# ---------------------------------------------------------------------------
if __name__ == "__main__":
    key = jax.random.PRNGKey(0)
    N_NODES, E_MEMBERS, C_IN, HIDDEN = 16, 8, 4, 32
    NUM_LAYERS, N_EDGES = 2, 48
    OUT_CH = 2  # loss == 'NormalCRPS'

    k_ens, k_x, k_e, k_p = jax.random.split(key, 4)
    ensemble = jax.random.normal(k_ens, (N_NODES, E_MEMBERS, C_IN), jnp.float32)
    x = jax.random.normal(k_x, (N_NODES, C_IN), jnp.float32)
    edge_src = jnp.arange(N_EDGES, dtype=jnp.int32) % N_NODES
    edge_dst = (edge_src + 1 + (jnp.arange(N_EDGES, dtype=jnp.int32) // N_NODES)) % N_NODES
    edge_attr = jax.random.normal(k_e, (N_EDGES, 1), jnp.float32)

    params = make_params(k_p, C_IN, HIDDEN, NUM_LAYERS, OUT_CH)

    out = gnn_forward(ensemble, x, edge_src, edge_dst, edge_attr, params)
    out = jax.block_until_ready(out)
    assert out.shape == (N_NODES, OUT_CH), out.shape

    ref = jax.block_until_ready(
        reference_forward(ensemble, x, edge_src, edge_dst, edge_attr, params))
    assert jnp.allclose(out, ref, atol=1e-3, rtol=1e-3), (
        float(jnp.max(jnp.abs(out - ref))))

    print("KERNEL_OK")
</pallas_src>

<mosaic_0001>
module attributes {stable_mosaic.version = 11 : i64} {
  func.func @kernel(%arg0: memref<128x4xf32, #tpu.memory_space<vmem>>, %arg1: memref<16x4xf32, #tpu.memory_space<vmem>>, %arg2: memref<48x1xf32, #tpu.memory_space<vmem>>, %arg3: memref<48x16xf32, #tpu.memory_space<vmem>>, %arg4: memref<16x48xf32, #tpu.memory_space<vmem>>, %arg5: memref<4x32xf32, #tpu.memory_space<vmem>>, %arg6: memref<1x32xf32, #tpu.memory_space<vmem>>, %arg7: memref<32x32xf32, #tpu.memory_space<vmem>>, %arg8: memref<1x32xf32, #tpu.memory_space<vmem>>, %arg9: memref<32x32xf32, #tpu.memory_space<vmem>>, %arg10: memref<1x32xf32, #tpu.memory_space<vmem>>, %arg11: memref<32x32xf32, #tpu.memory_space<vmem>>, %arg12: memref<1x32xf32, #tpu.memory_space<vmem>>, %arg13: memref<4x32xf32, #tpu.memory_space<vmem>>, %arg14: memref<32x32xf32, #tpu.memory_space<vmem>>, %arg15: memref<1x32xf32, #tpu.memory_space<vmem>>, %arg16: memref<1x32xf32, #tpu.memory_space<vmem>>, %arg17: memref<1x32xf32, #tpu.memory_space<vmem>>, %arg18: memref<32x32xf32, #tpu.memory_space<vmem>>, %arg19: memref<1x32xf32, #tpu.memory_space<vmem>>, %arg20: memref<32x32xf32, #tpu.memory_space<vmem>>, %arg21: memref<1x32xf32, #tpu.memory_space<vmem>>, %arg22: memref<1x32xf32, #tpu.memory_space<vmem>>, %arg23: memref<1x32xf32, #tpu.memory_space<vmem>>, %arg24: memref<32x32xf32, #tpu.memory_space<vmem>>, %arg25: memref<1x32xf32, #tpu.memory_space<vmem>>, %arg26: memref<32x32xf32, #tpu.memory_space<vmem>>, %arg27: memref<1x32xf32, #tpu.memory_space<vmem>>, %arg28: memref<32x2xf32, #tpu.memory_space<vmem>>, %arg29: memref<1x2xf32, #tpu.memory_space<vmem>>, %arg30: memref<16x2xf32, #tpu.memory_space<vmem>>) attributes {dimension_semantics = [], scalar_prefetch = 0 : i64, scratch_operands = 0 : i64, tpu.core_type = #tpu.core_type<tc>} {
    %c0 = arith.constant 0 : index
    %c0_0 = arith.constant 0 : index
    %0 = vector.load %arg0[%c0, %c0_0] : memref<128x4xf32, #tpu.memory_space<vmem>>, vector<128x4xf32>
    %c0_1 = arith.constant 0 : index
    %c0_2 = arith.constant 0 : index
    %1 = vector.load %arg5[%c0_1, %c0_2] : memref<4x32xf32, #tpu.memory_space<vmem>>, vector<4x32xf32>
    %cst = arith.constant dense<0.000000e+00> : vector<128x32xf32>
    %2 = tpu.matmul %0, %1, %cst {dimension_numbers = #tpu.dot_dimension_numbers<[1], [0], [0], [1], [0, 0, 1, 1], [], []>} : vector<128x4xf32>, vector<4x32xf32>, vector<128x32xf32> -> vector<128x32xf32>
    %c0_3 = arith.constant 0 : index
    %c0_4 = arith.constant 0 : index
    %3 = vector.load %arg6[%c0_3, %c0_4] : memref<1x32xf32, #tpu.memory_space<vmem>>, vector<1x32xf32>
    %4 = vector.broadcast %3 : vector<1x32xf32> to vector<128x32xf32>
    %5 = arith.addf %2, %4 : vector<128x32xf32>
    %cst_5 = arith.constant 0.000000e+00 : f32
    %6 = vector.broadcast %cst_5 : f32 to vector<128x32xf32>
    %7 = arith.maximumf %5, %6 : vector<128x32xf32>
    %c0_6 = arith.constant 0 : index
    %c0_7 = arith.constant 0 : index
    %8 = vector.load %arg7[%c0_6, %c0_7] : memref<32x32xf32, #tpu.memory_space<vmem>>, vector<32x32xf32>
    %cst_8 = arith.constant dense<0.000000e+00> : vector<128x32xf32>
    %9 = tpu.matmul %7, %8, %cst_8 {dimension_numbers = #tpu.dot_dimension_numbers<[1], [0], [0], [1], [0, 0, 1, 1], [], []>} : vector<128x32xf32>, vector<32x32xf32>, vector<128x32xf32> -> vector<128x32xf32>
    %10 = vector.shape_cast %9 : vector<128x32xf32> to vector<16x8x32xf32>
    %cst_9 = arith.constant dense<0.000000e+00> : vector<16x32xf32>
    %11 = vector.multi_reduction <add>, %10, %cst_9 [1] : vector<16x8x32xf32> to vector<16x32xf32>
    %c0_10 = arith.constant 0 : index
    %c0_11 = arith.constant 0 : index
    %12 = vector.load %arg8[%c0_10, %c0_11] : memref<1x32xf32, #tpu.memory_space<vmem>>, vector<1x32xf32>
    %cst_12 = arith.constant 8.000000e+00 : f32
    %13 = vector.broadcast %cst_12 : f32 to vector<1x32xf32>
    %14 = arith.mulf %13, %12 : vector<1x32xf32>
    %15 = vector.broadcast %14 : vector<1x32xf32> to vector<16x32xf32>
    %16 = arith.addf %11, %15 : vector<16x32xf32>
    %c0_13 = arith.constant 0 : index
    %c0_14 = arith.constant 0 : index
    %17 = vector.load %arg9[%c0_13, %c0_14] : memref<32x32xf32, #tpu.memory_space<vmem>>, vector<32x32xf32>
    %cst_15 = arith.constant dense<0.000000e+00> : vector<16x32xf32>
    %18 = tpu.matmul %16, %17, %cst_15 {dimension_numbers = #tpu.dot_dimension_numbers<[1], [0], [0], [1], [0, 0, 1, 1], [], []>} : vector<16x32xf32>, vector<32x32xf32>, vector<16x32xf32> -> vector<16x32xf32>
    %c0_16 = arith.constant 0 : index
    %c0_17 = arith.constant 0 : index
    %19 = vector.load %arg10[%c0_16, %c0_17] : memref<1x32xf32, #tpu.memory_space<vmem>>, vector<1x32xf32>
    %20 = vector.broadcast %19 : vector<1x32xf32> to vector<16x32xf32>
    %21 = arith.addf %18, %20 : vector<16x32xf32>
    %cst_18 = arith.constant 0.000000e+00 : f32
    %22 = vector.broadcast %cst_18 : f32 to vector<16x32xf32>
    %23 = arith.maximumf %21, %22 : vector<16x32xf32>
    %c0_19 = arith.constant 0 : index
    %c0_20 = arith.constant 0 : index
    %24 = vector.load %arg11[%c0_19, %c0_20] : memref<32x32xf32, #tpu.memory_space<vmem>>, vector<32x32xf32>
    %cst_21 = arith.constant dense<0.000000e+00> : vector<16x32xf32>
    %25 = tpu.matmul %23, %24, %cst_21 {dimension_numbers = #tpu.dot_dimension_numbers<[1], [0], [0], [1], [0, 0, 1, 1], [], []>} : vector<16x32xf32>, vector<32x32xf32>, vector<16x32xf32> -> vector<16x32xf32>
    %c0_22 = arith.constant 0 : index
    %c0_23 = arith.constant 0 : index
    %26 = vector.load %arg12[%c0_22, %c0_23] : memref<1x32xf32, #tpu.memory_space<vmem>>, vector<1x32xf32>
    %27 = vector.broadcast %26 : vector<1x32xf32> to vector<16x32xf32>
    %28 = arith.addf %25, %27 : vector<16x32xf32>
    %c0_24 = arith.constant 0 : index
    %c0_25 = arith.constant 0 : index
    %29 = vector.load %arg1[%c0_24, %c0_25] : memref<16x4xf32, #tpu.memory_space<vmem>>, vector<16x4xf32>
    %c0_26 = arith.constant 0 : index
    %c0_27 = arith.constant 0 : index
    %30 = vector.load %arg13[%c0_26, %c0_27] : memref<4x32xf32, #tpu.memory_space<vmem>>, vector<4x32xf32>
    %cst_28 = arith.constant dense<0.000000e+00> : vector<16x32xf32>
    %31 = tpu.matmul %29, %30, %cst_28 {dimension_numbers = #tpu.dot_dimension_numbers<[1], [0], [0], [1], [0, 0, 1, 1], [], []>} : vector<16x4xf32>, vector<4x32xf32>, vector<16x32xf32> -> vector<16x32xf32>
    %c0_29 = arith.constant 0 : index
    %c0_30 = arith.constant 0 : index
    %32 = vector.load %arg14[%c0_29, %c0_30] : memref<32x32xf32, #tpu.memory_space<vmem>>, vector<32x32xf32>
    %cst_31 = arith.constant dense<0.000000e+00> : vector<16x32xf32>
    %33 = tpu.matmul %28, %32, %cst_31 {dimension_numbers = #tpu.dot_dimension_numbers<[1], [0], [0], [1], [0, 0, 1, 1], [], []>} : vector<16x32xf32>, vector<32x32xf32>, vector<16x32xf32> -> vector<16x32xf32>
    %34 = arith.addf %31, %33 : vector<16x32xf32>
    %c0_32 = arith.constant 0 : index
    %c0_33 = arith.constant 0 : index
    %35 = vector.load %arg15[%c0_32, %c0_33] : memref<1x32xf32, #tpu.memory_space<vmem>>, vector<1x32xf32>
    %36 = vector.broadcast %35 : vector<1x32xf32> to vector<16x32xf32>
    %37 = arith.addf %34, %36 : vector<16x32xf32>
    %c0_34 = arith.constant 0 : index
    %c0_35 = arith.constant 0 : index
    %38 = vector.load %arg2[%c0_34, %c0_35] : memref<48x1xf32, #tpu.memory_space<vmem>>, vector<48x1xf32>
    %c0_36 = arith.constant 0 : index
    %c0_37 = arith.constant 0 : index
    %39 = vector.load %arg3[%c0_36, %c0_37] : memref<48x16xf32, #tpu.memory_space<vmem>>, vector<48x16xf32>
    %c0_38 = arith.constant 0 : index
    %c0_39 = arith.constant 0 : index
    %40 = vector.load %arg4[%c0_38, %c0_39] : memref<16x48xf32, #tpu.memory_space<vmem>>, vector<16x48xf32>
    %c0_40 = arith.constant 0 : index
    %c0_41 = arith.constant 0 : index
    %41 = vector.load %arg16[%c0_40, %c0_41] : memref<1x32xf32, #tpu.memory_space<vmem>>, vector<1x32xf32>
    %42 = vector.broadcast %38 : vector<48x1xf32> to vector<48x32xf32>
    %43 = vector.broadcast %41 : vector<1x32xf32> to vector<48x32xf32>
    %44 = arith.mulf %42, %43 : vector<48x32xf32>
    %c0_42 = arith.constant 0 : index
    %c0_43 = arith.constant 0 : index
    %45 = vector.load %arg17[%c0_42, %c0_43] : memref<1x32xf32, #tpu.memory_space<vmem>>, vector<1x32xf32>
    %46 = vector.broadcast %45 : vector<1x32xf32> to vector<48x32xf32>
    %47 = arith.addf %44, %46 : vector<48x32xf32>
    %cst_44 = arith.constant dense<0.000000e+00> : vector<48x32xf32>
    %48 = tpu.matmul %39, %37, %cst_44 {dimension_numbers = #tpu.dot_dimension_numbers<[1], [0], [0], [1], [0, 0, 1, 1], [], []>} : vector<48x16xf32>, vector<16x32xf32>, vector<48x32xf32> -> vector<48x32xf32>
    %49 = arith.addf %48, %47 : vector<48x32xf32>
    %cst_45 = arith.constant 0.000000e+00 : f32
    %50 = vector.broadcast %cst_45 : f32 to vector<48x32xf32>
    %51 = arith.maximumf %49, %50 : vector<48x32xf32>
    %cst_46 = arith.constant dense<0.000000e+00> : vector<16x32xf32>
    %52 = tpu.matmul %40, %51, %cst_46 {dimension_numbers = #tpu.dot_dimension_numbers<[1], [0], [0], [1], [0, 0, 1, 1], [], []>} : vector<16x48xf32>, vector<48x32xf32>, vector<16x32xf32> -> vector<16x32xf32>
    %cst_47 = arith.constant 1.000000e+00 : f32
    %53 = vector.broadcast %cst_47 : f32 to vector<16x32xf32>
    %54 = arith.mulf %53, %37 : vector<16x32xf32>
    %55 = arith.addf %54, %52 : vector<16x32xf32>
    %c0_48 = arith.constant 0 : index
    %c0_49 = arith.constant 0 : index
    %56 = vector.load %arg18[%c0_48, %c0_49] : memref<32x32xf32, #tpu.memory_space<vmem>>, vector<32x32xf32>
    %cst_50 = arith.constant dense<0.000000e+00> : vector<16x32xf32>
    %57 = tpu.matmul %55, %56, %cst_50 {dimension_numbers = #tpu.dot_dimension_numbers<[1], [0], [0], [1], [0, 0, 1, 1], [], []>} : vector<16x32xf32>, vector<32x32xf32>, vector<16x32xf32> -> vector<16x32xf32>
    %c0_51 = arith.constant 0 : index
    %c0_52 = arith.constant 0 : index
    %58 = vector.load %arg19[%c0_51, %c0_52] : memref<1x32xf32, #tpu.memory_space<vmem>>, vector<1x32xf32>
    %59 = vector.broadcast %58 : vector<1x32xf32> to vector<16x32xf32>
    %60 = arith.addf %57, %59 : vector<16x32xf32>
    %cst_53 = arith.constant 0.000000e+00 : f32
    %61 = vector.broadcast %cst_53 : f32 to vector<16x32xf32>
    %62 = arith.maximumf %60, %61 : vector<16x32xf32>
    %c0_54 = arith.constant 0 : index
    %c0_55 = arith.constant 0 : index
    %63 = vector.load %arg20[%c0_54, %c0_55] : memref<32x32xf32, #tpu.memory_space<vmem>>, vector<32x32xf32>
    %cst_56 = arith.constant dense<0.000000e+00> : vector<16x32xf32>
    %64 = tpu.matmul %62, %63, %cst_56 {dimension_numbers = #tpu.dot_dimension_numbers<[1], [0], [0], [1], [0, 0, 1, 1], [], []>} : vector<16x32xf32>, vector<32x32xf32>, vector<16x32xf32> -> vector<16x32xf32>
    %c0_57 = arith.constant 0 : index
    %c0_58 = arith.constant 0 : index
    %65 = vector.load %arg21[%c0_57, %c0_58] : memref<1x32xf32, #tpu.memory_space<vmem>>, vector<1x32xf32>
    %66 = vector.broadcast %65 : vector<1x32xf32> to vector<16x32xf32>
    %67 = arith.addf %64, %66 : vector<16x32xf32>
    %cst_59 = arith.constant 0.000000e+00 : f32
    %68 = vector.broadcast %cst_59 : f32 to vector<16x32xf32>
    %69 = arith.maximumf %67, %68 : vector<16x32xf32>
    %c0_60 = arith.constant 0 : index
    %c0_61 = arith.constant 0 : index
    %70 = vector.load %arg22[%c0_60, %c0_61] : memref<1x32xf32, #tpu.memory_space<vmem>>, vector<1x32xf32>
    %71 = vector.broadcast %38 : vector<48x1xf32> to vector<48x32xf32>
    %72 = vector.broadcast %70 : vector<1x32xf32> to vector<48x32xf32>
    %73 = arith.mulf %71, %72 : vector<48x32xf32>
    %c0_62 = arith.constant 0 : index
    %c0_63 = arith.constant 0 : index
    %74 = vector.load %arg23[%c0_62, %c0_63] : memref<1x32xf32, #tpu.memory_space<vmem>>, vector<1x32xf32>
    %75 = vector.broadcast %74 : vector<1x32xf32> to vector<48x32xf32>
    %76 = arith.addf %73, %75 : vector<48x32xf32>
    %cst_64 = arith.constant dense<0.000000e+00> : vector<48x32xf32>
    %77 = tpu.matmul %39, %69, %cst_64 {dimension_numbers = #tpu.dot_dimension_numbers<[1], [0], [0], [1], [0, 0, 1, 1], [], []>} : vector<48x16xf32>, vector<16x32xf32>, vector<48x32xf32> -> vector<48x32xf32>
    %78 = arith.addf %77, %76 : vector<48x32xf32>
    %cst_65 = arith.constant 0.000000e+00 : f32
    %79 = vector.broadcast %cst_65 : f32 to vector<48x32xf32>
    %80 = arith.maximumf %78, %79 : vector<48x32xf32>
    %cst_66 = arith.constant dense<0.000000e+00> : vector<16x32xf32>
    %81 = tpu.matmul %40, %80, %cst_66 {dimension_numbers = #tpu.dot_dimension_numbers<[1], [0], [0], [1], [0, 0, 1, 1], [], []>} : vector<16x48xf32>, vector<48x32xf32>, vector<16x32xf32> -> vector<16x32xf32>
    %cst_67 = arith.constant 1.000000e+00 : f32
    %82 = vector.broadcast %cst_67 : f32 to vector<16x32xf32>
    %83 = arith.mulf %82, %69 : vector<16x32xf32>
    %84 = arith.addf %83, %81 : vector<16x32xf32>
    %c0_68 = arith.constant 0 : index
    %c0_69 = arith.constant 0 : index
    %85 = vector.load %arg24[%c0_68, %c0_69] : memref<32x32xf32, #tpu.memory_space<vmem>>, vector<32x32xf32>
    %cst_70 = arith.constant dense<0.000000e+00> : vector<16x32xf32>
    %86 = tpu.matmul %84, %85, %cst_70 {dimension_numbers = #tpu.dot_dimension_numbers<[1], [0], [0], [1], [0, 0, 1, 1], [], []>} : vector<16x32xf32>, vector<32x32xf32>, vector<16x32xf32> -> vector<16x32xf32>
    %c0_71 = arith.constant 0 : index
    %c0_72 = arith.constant 0 : index
    %87 = vector.load %arg25[%c0_71, %c0_72] : memref<1x32xf32, #tpu.memory_space<vmem>>, vector<1x32xf32>
    %88 = vector.broadcast %87 : vector<1x32xf32> to vector<16x32xf32>
    %89 = arith.addf %86, %88 : vector<16x32xf32>
    %cst_73 = arith.constant 0.000000e+00 : f32
    %90 = vector.broadcast %cst_73 : f32 to vector<16x32xf32>
    %91 = arith.maximumf %89, %90 : vector<16x32xf32>
    %c0_74 = arith.constant 0 : index
    %c0_75 = arith.constant 0 : index
    %92 = vector.load %arg26[%c0_74, %c0_75] : memref<32x32xf32, #tpu.memory_space<vmem>>, vector<32x32xf32>
    %cst_76 = arith.constant dense<0.000000e+00> : vector<16x32xf32>
    %93 = tpu.matmul %91, %92, %cst_76 {dimension_numbers = #tpu.dot_dimension_numbers<[1], [0], [0], [1], [0, 0, 1, 1], [], []>} : vector<16x32xf32>, vector<32x32xf32>, vector<16x32xf32> -> vector<16x32xf32>
    %c0_77 = arith.constant 0 : index
    %c0_78 = arith.constant 0 : index
    %94 = vector.load %arg27[%c0_77, %c0_78] : memref<1x32xf32, #tpu.memory_space<vmem>>, vector<1x32xf32>
    %95 = vector.broadcast %94 : vector<1x32xf32> to vector<16x32xf32>
    %96 = arith.addf %93, %95 : vector<16x32xf32>
    %cst_79 = arith.constant 0.000000e+00 : f32
    %97 = vector.broadcast %cst_79 : f32 to vector<16x32xf32>
    %98 = arith.maximumf %96, %97 : vector<16x32xf32>
    %99 = arith.addf %69, %98 : vector<16x32xf32>
    %c0_80 = arith.constant 0 : index
    %c0_81 = arith.constant 0 : index
    %100 = vector.load %arg28[%c0_80, %c0_81] : memref<32x2xf32, #tpu.memory_space<vmem>>, vector<32x2xf32>
    %cst_82 = arith.constant dense<0.000000e+00> : vector<16x2xf32>
    %101 = tpu.matmul %99, %100, %cst_82 {dimension_numbers = #tpu.dot_dimension_numbers<[1], [0], [0], [1], [0, 0, 1, 1], [], []>} : vector<16x32xf32>, vector<32x2xf32>, vector<16x2xf32> -> vector<16x2xf32>
    %c0_83 = arith.constant 0 : index
    %c0_84 = arith.constant 0 : index
    %102 = vector.load %arg29[%c0_83, %c0_84] : memref<1x2xf32, #tpu.memory_space<vmem>>, vector<1x2xf32>
    %103 = vector.broadcast %102 : vector<1x2xf32> to vector<16x2xf32>
    %104 = arith.addf %101, %103 : vector<16x2xf32>
    %c0_85 = arith.constant 0 : index
    %c0_86 = arith.constant 0 : index
    %105 = vector.load %arg30[%c0_85, %c0_86] : memref<16x2xf32, #tpu.memory_space<vmem>>, vector<16x2xf32>
    tpu.vector_store %arg30[%c0_85, %c0_86], %104 {strides = array<i32>} : memref<16x2xf32, #tpu.memory_space<vmem>>, vector<16x2xf32>,
    return
  }
}

</mosaic_0001>

<llo_original>
// kernel: tpu_custom_call.1
$region0: #{tpu_custom_call.1}
  #allocation0 [shape = 'u32[]', space=smem, size = 0x4, offset = 0x4, fixed_abs, tag = 'smem constant byte address 0x4 - core index']
  #allocation1 [shape = 'u32[144,128]{1,0:T(1,128)}', space=vmem, size = 0x12000, scoped, tag = 'internal scratch']
  %s0 = inlined_call_operand.smem [shape: u32[31], index: -1, kind: input, shape index: {}]
  %s1 = sld [smem:[%s0]]
  %s2 = scalar_lea.smem %s0, 1
  %s3 = sld [smem:[%s2]]
  %s4 = scalar_lea.smem %s0, 2
  %s5 = sld [smem:[%s4]]
  %s6 = scalar_lea.smem %s0, 3
  %s7 = sld [smem:[%s6]]
  %s8 = scalar_lea.smem %s0, 4
  %s9 = sld [smem:[%s8]]
  %s10 = scalar_lea.smem %s0, 5
  %s11 = sld [smem:[%s10]]
  %s12 = scalar_lea.smem %s0, 6
  %s13 = sld [smem:[%s12]]
  %s14 = scalar_lea.smem %s0, 7
  %s15 = sld [smem:[%s14]]
  %s16 = scalar_lea.smem %s0, 8
  %s17 = sld [smem:[%s16]]
  %s18 = scalar_lea.smem %s0, 9
  %s19 = sld [smem:[%s18]]
  %s20 = scalar_lea.smem %s0, 10
  %s21 = sld [smem:[%s20]]
  %s22 = scalar_lea.smem %s0, 11
  %s23 = sld [smem:[%s22]]
  %s24 = scalar_lea.smem %s0, 12
  %s25 = sld [smem:[%s24]]
  %s26 = scalar_lea.smem %s0, 13
  %s27 = sld [smem:[%s26]]
  %s28 = scalar_lea.smem %s0, 14
  %s29 = sld [smem:[%s28]]
  %s30 = scalar_lea.smem %s0, 15
  %s31 = sld [smem:[%s30]]
  %s32 = scalar_lea.smem %s0, 16
  %s33 = sld [smem:[%s32]]
  %s34 = scalar_lea.smem %s0, 17
  %s35 = sld [smem:[%s34]]
  %s36 = scalar_lea.smem %s0, 18
  %s37 = sld [smem:[%s36]]
  %s38 = scalar_lea.smem %s0, 19
  %s39 = sld [smem:[%s38]]
  %s40 = scalar_lea.smem %s0, 20
  %s41 = sld [smem:[%s40]]
  %s42 = scalar_lea.smem %s0, 21
  %s43 = sld [smem:[%s42]]
  %s44 = scalar_lea.smem %s0, 22
  %s45 = sld [smem:[%s44]]
  %s46 = scalar_lea.smem %s0, 23
  %s47 = sld [smem:[%s46]]
  %s48 = scalar_lea.smem %s0, 24
  %s49 = sld [smem:[%s48]]
  %s50 = scalar_lea.smem %s0, 25
  %s51 = sld [smem:[%s50]]
  %s52 = scalar_lea.smem %s0, 26
  %s53 = sld [smem:[%s52]]
  %s54 = scalar_lea.smem %s0, 27
  %s55 = sld [smem:[%s54]]
  %s56 = scalar_lea.smem %s0, 28
  %s57 = sld [smem:[%s56]]
  %s58 = scalar_lea.smem %s0, 29
  %s59 = sld [smem:[%s58]]
  %s60 = scalar_lea.smem %s0, 30
  %s61 = sld [smem:[%s60]]
  %s62 = sld [smem:[#allocation0]]
  $region130: #{tpu_custom_call.1} parent=0
    _
  %s64 = ssub.s32 1, %s62
  %s65 = scalar_select 0, %s64, %s62
  // Predicated region
  $region2: #{tpu_custom_call.1} parent=0 // pred_check
    _
  $region3: #{tpu_custom_call.1} parent=0 // pred_check_branch
    %67 = sbr.rel (0) target = $region5
  $region4: #{tpu_custom_call.1} parent=0 // pred_region
    _
  $region5: #{tpu_custom_call.1} parent=0 // pred_fallthru
    _
  // Predicated region
  $region6: #{tpu_custom_call.1} parent=0 // pred_check
    _
  $region7: #{tpu_custom_call.1} parent=0 // pred_check_branch
    %69 = sbr.rel (0) target = $region9
  $region8: #{tpu_custom_call.1} parent=0 // pred_region
    _
  $region9: #{tpu_custom_call.1} parent=0 // pred_fallthru
    _
  // Predicated region
  $region10: #{tpu_custom_call.1} parent=0 // pred_check
    _
  $region11: #{tpu_custom_call.1} parent=0 // pred_check_branch
    %71 = sbr.rel (0) target = $region13
  $region12: #{tpu_custom_call.1} parent=0 // pred_region
    _
  $region13: #{tpu_custom_call.1} parent=0 // pred_fallthru
    _
  // Predicated region
  $region14: #{tpu_custom_call.1} parent=0 // pred_check
    _
  $region15: #{tpu_custom_call.1} parent=0 // pred_check_branch
    %73 = sbr.rel (0) target = $region17
  $region16: #{tpu_custom_call.1} parent=0 // pred_region
    _
  $region17: #{tpu_custom_call.1} parent=0 // pred_fallthru
    _
  // Predicated region
  $region18: #{tpu_custom_call.1} parent=0 // pred_check
    _
  $region19: #{tpu_custom_call.1} parent=0 // pred_check_branch
    %75 = sbr.rel (0) target = $region21
  $region20: #{tpu_custom_call.1} parent=0 // pred_region
    _
  $region21: #{tpu_custom_call.1} parent=0 // pred_fallthru
    _
  // Predicated region
  $region22: #{tpu_custom_call.1} parent=0 // pred_check
    _
  $region23: #{tpu_custom_call.1} parent=0 // pred_check_branch
    %77 = sbr.rel (0) target = $region25
  $region24: #{tpu_custom_call.1} parent=0 // pred_region
    _
  $region25: #{tpu_custom_call.1} parent=0 // pred_fallthru
    _
  // Predicated region
  $region26: #{tpu_custom_call.1} parent=0 // pred_check
    _
  $region27: #{tpu_custom_call.1} parent=0 // pred_check_branch
    %79 = sbr.rel (0) target = $region29
  $region28: #{tpu_custom_call.1} parent=0 // pred_region
    _
  $region29: #{tpu_custom_call.1} parent=0 // pred_fallthru
    _
  // Predicated region
  $region30: #{tpu_custom_call.1} parent=0 // pred_check
    _
  $region31: #{tpu_custom_call.1} parent=0 // pred_check_branch
    %81 = sbr.rel (0) target = $region33
  $region32: #{tpu_custom_call.1} parent=0 // pred_region
    _
  $region33: #{tpu_custom_call.1} parent=0 // pred_fallthru
    _
  // Predicated region
  $region34: #{tpu_custom_call.1} parent=0 // pred_check
    _
  $region35: #{tpu_custom_call.1} parent=0 // pred_check_branch
    %83 = sbr.rel (0) target = $region37
  $region36: #{tpu_custom_call.1} parent=0 // pred_region
    _
  $region37: #{tpu_custom_call.1} parent=0 // pred_fallthru
    _
  // Predicated region
  $region38: #{tpu_custom_call.1} parent=0 // pred_check
    _
  $region39: #{tpu_custom_call.1} parent=0 // pred_check_branch
    %85 = sbr.rel (0) target = $region41
  $region40: #{tpu_custom_call.1} parent=0 // pred_region
    _
  $region41: #{tpu_custom_call.1} parent=0 // pred_fallthru
    _
  // Predicated region
  $region42: #{tpu_custom_call.1} parent=0 // pred_check
    _
  $region43: #{tpu_custom_call.1} parent=0 // pred_check_branch
    %87 = sbr.rel (0) target = $region45
  $region44: #{tpu_custom_call.1} parent=0 // pred_region
    _
  $region45: #{tpu_custom_call.1} parent=0 // pred_fallthru
    _
  // Predicated region
  $region46: #{tpu_custom_call.1} parent=0 // pred_check
    _
  $region47: #{tpu_custom_call.1} parent=0 // pred_check_branch
    %89 = sbr.rel (0) target = $region49
  $region48: #{tpu_custom_call.1} parent=0 // pred_region
    _
  $region49: #{tpu_custom_call.1} parent=0 // pred_fallthru
    _
  // Predicated region
  $region50: #{tpu_custom_call.1} parent=0 // pred_check
    _
  $region51: #{tpu_custom_call.1} parent=0 // pred_check_branch
    %91 = sbr.rel (0) target = $region53
  $region52: #{tpu_custom_call.1} parent=0 // pred_region
    _
  $region53: #{tpu_custom_call.1} parent=0 // pred_fallthru
    _
  // Predicated region
  $region54: #{tpu_custom_call.1} parent=0 // pred_check
    _
  $region55: #{tpu_custom_call.1} parent=0 // pred_check_branch
    %93 = sbr.rel (0) target = $region57
  $region56: #{tpu_custom_call.1} parent=0 // pred_region
    _
  $region57: #{tpu_custom_call.1} parent=0 // pred_fallthru
    _
  // Predicated region
  $region58: #{tpu_custom_call.1} parent=0 // pred_check
    _
  $region59: #{tpu_custom_call.1} parent=0 // pred_check_branch
    %95 = sbr.rel (0) target = $region61
  $region60: #{tpu_custom_call.1} parent=0 // pred_region
    _
  $region61: #{tpu_custom_call.1} parent=0 // pred_fallthru
    _
  // Predicated region
  $region62: #{tpu_custom_call.1} parent=0 // pred_check
    _
  $region63: #{tpu_custom_call.1} parent=0 // pred_check_branch
    %97 = sbr.rel (0) target = $region65
  $region64: #{tpu_custom_call.1} parent=0 // pred_region
    _
  $region65: #{tpu_custom_call.1} parent=0 // pred_fallthru
    _
  // Predicated region
  $region66: #{tpu_custom_call.1} parent=0 // pred_check
    _
  $region67: #{tpu_custom_call.1} parent=0 // pred_check_branch
    %99 = sbr.rel (0) target = $region69
  $region68: #{tpu_custom_call.1} parent=0 // pred_region
    _
  $region69: #{tpu_custom_call.1} parent=0 // pred_fallthru
    _
  // Predicated region
  $region70: #{tpu_custom_call.1} parent=0 // pred_check
    _
  $region71: #{tpu_custom_call.1} parent=0 // pred_check_branch
    %101 = sbr.rel (0) target = $region73
  $region72: #{tpu_custom_call.1} parent=0 // pred_region
    _
  $region73: #{tpu_custom_call.1} parent=0 // pred_fallthru
    _
  // Predicated region
  $region74: #{tpu_custom_call.1} parent=0 // pred_check
    _
  $region75: #{tpu_custom_call.1} parent=0 // pred_check_branch
    %103 = sbr.rel (0) target = $region77
  $region76: #{tpu_custom_call.1} parent=0 // pred_region
    _
  $region77: #{tpu_custom_call.1} parent=0 // pred_fallthru
    _
  // Predicated region
  $region78: #{tpu_custom_call.1} parent=0 // pred_check
    _
  $region79: #{tpu_custom_call.1} parent=0 // pred_check_branch
    %105 = sbr.rel (0) target = $region81
  $region80: #{tpu_custom_call.1} parent=0 // pred_region
    _
  $region81: #{tpu_custom_call.1} parent=0 // pred_fallthru
    _
  // Predicated region
  $region82: #{tpu_custom_call.1} parent=0 // pred_check
    _
  $region83: #{tpu_custom_call.1} parent=0 // pred_check_branch
    %107 = sbr.rel (0) target = $region85
  $region84: #{tpu_custom_call.1} parent=0 // pred_region
    _
  $region85: #{tpu_custom_call.1} parent=0 // pred_fallthru
    _
  // Predicated region
  $region86: #{tpu_custom_call.1} parent=0 // pred_check
    _
  $region87: #{tpu_custom_call.1} parent=0 // pred_check_branch
    %109 = sbr.rel (0) target = $region89
  $region88: #{tpu_custom_call.1} parent=0 // pred_region
    _
  $region89: #{tpu_custom_call.1} parent=0 // pred_fallthru
    _
  // Predicated region
  $region90: #{tpu_custom_call.1} parent=0 // pred_check
    _
  $region91: #{tpu_custom_call.1} parent=0 // pred_check_branch
    %111 = sbr.rel (0) target = $region93
  $region92: #{tpu_custom_call.1} parent=0 // pred_region
    _
  $region93: #{tpu_custom_call.1} parent=0 // pred_fallthru
    _
  // Predicated region
  $region94: #{tpu_custom_call.1} parent=0 // pred_check
    _
  $region95: #{tpu_custom_call.1} parent=0 // pred_check_branch
    %113 = sbr.rel (0) target = $region97
  $region96: #{tpu_custom_call.1} parent=0 // pred_region
    _
  $region97: #{tpu_custom_call.1} parent=0 // pred_fallthru
    _
  // Predicated region
  $region98: #{tpu_custom_call.1} parent=0 // pred_check
    _
  $region99: #{tpu_custom_call.1} parent=0 // pred_check_branch
    %115 = sbr.rel (0) target = $region101
  $region100: #{tpu_custom_call.1} parent=0 // pred_region
    _
  $region101: #{tpu_custom_call.1} parent=0 // pred_fallthru
    _
  // Predicated region
  $region102: #{tpu_custom_call.1} parent=0 // pred_check
    _
  $region103: #{tpu_custom_call.1} parent=0 // pred_check_branch
    %117 = sbr.rel (0) target = $region105
  $region104: #{tpu_custom_call.1} parent=0 // pred_region
    _
  $region105: #{tpu_custom_call.1} parent=0 // pred_fallthru
    _
  // Predicated region
  $region106: #{tpu_custom_call.1} parent=0 // pred_check
    _
  $region107: #{tpu_custom_call.1} parent=0 // pred_check_branch
    %119 = sbr.rel (0) target = $region109
  $region108: #{tpu_custom_call.1} parent=0 // pred_region
    _
  $region109: #{tpu_custom_call.1} parent=0 // pred_fallthru
    _
  // Predicated region
  $region110: #{tpu_custom_call.1} parent=0 // pred_check
    _
  $region111: #{tpu_custom_call.1} parent=0 // pred_check_branch
    %121 = sbr.rel (0) target = $region113
  $region112: #{tpu_custom_call.1} parent=0 // pred_region
    _
  $region113: #{tpu_custom_call.1} parent=0 // pred_fallthru
    _
  // Predicated region
  $region114: #{tpu_custom_call.1} parent=0 // pred_check
    _
  $region115: #{tpu_custom_call.1} parent=0 // pred_check_branch
    %123 = sbr.rel (0) target = $region117
  $region116: #{tpu_custom_call.1} parent=0 // pred_region
    _
  $region117: #{tpu_custom_call.1} parent=0 // pred_fallthru
    _
  // Predicated region
  $region118: #{tpu_custom_call.1} parent=0 // pred_check
    _
  $region119: #{tpu_custom_call.1} parent=0 // pred_check_branch
    %125 = sbr.rel (0) target = $region121
  $region120: #{tpu_custom_call.1} parent=0 // pred_region
    _
  $region121: #{tpu_custom_call.1} parent=0 // pred_fallthru
    _
  %v126 = vld [vmem:[%s1] sm:$0xff]
  %v127 = vld [vmem:[%s1 + $0x8] sm:$0xff]
  %v128 = vld [vmem:[%s1 + $0x10] sm:$0xff]
  %v129 = vld [vmem:[%s1 + $0x18] sm:$0xff]
  %v130 = vld [vmem:[%s1 + $0x20] sm:$0xff]
  %v131 = vld [vmem:[%s1 + $0x28] sm:$0xff]
  %v132 = vld [vmem:[%s1 + $0x30] sm:$0xff]
  %v133 = vld [vmem:[%s1 + $0x38] sm:$0xff]
  %v134 = vld [vmem:[%s1 + $0x40] sm:$0xff]
  %v135 = vld [vmem:[%s1 + $0x48] sm:$0xff]
  %v136 = vld [vmem:[%s1 + $0x50] sm:$0xff]
  %v137 = vld [vmem:[%s1 + $0x58] sm:$0xff]
  %v138 = vld [vmem:[%s1 + $0x60] sm:$0xff]
  %v139 = vld [vmem:[%s1 + $0x68] sm:$0xff]
  %v140 = vld [vmem:[%s1 + $0x70] sm:$0xff]
  %v141 = vld [vmem:[%s1 + $0x78] sm:$0xff]
  %v142 = vld [vmem:[%s11] sm:$0xf]
  %v143 = vld [vmem:[%s13] sm:$0x1]
  %v145 = vlaneseq
  %v146 = vshrl.u32 %v145, 7
  %v147 = vsub.s32 0, %v146
  %v148 = vrot.slane %v143, %v147
  %vm150 = vcmask 31744
  %v152 = vsel %vm150, %v126, 0
  %v155 = vsel %vm150, %v127, 0
  %v158 = vsel %vm150, %v128, 0
  %v161 = vsel %vm150, %v129, 0
  %v164 = vsel %vm150, %v130, 0
  %v167 = vsel %vm150, %v131, 0
  %v170 = vsel %vm150, %v132, 0
  %v173 = vsel %vm150, %v133, 0
  %v176 = vsel %vm150, %v134, 0
  %v179 = vsel %vm150, %v135, 0
  %v182 = vsel %vm150, %v136, 0
  %v185 = vsel %vm150, %v137, 0
  %v188 = vsel %vm150, %v138, 0
  %v191 = vsel %vm150, %v139, 0
  %v194 = vsel %vm150, %v140, 0
  %v197 = vsel %vm150, %v141, 0
  %vm199 = vcmask 1043456
  %v201 = vsel %vm199, %v142, 0
  %203 = vmatprep.subr.mxu0 0.0
  %204 = vmatpush1.msra.mxu0 %v201
  %205 = vmatprep.subr.mxu0 0.0
  %206 = vmatpush1.msra.mxu0 0.0
  %207 = vmatprep.subr.mxu0 0.0
  %208 = vmatpush1.msra.mxu0 0.0
  %209 = vmatprep.subr.mxu0 0.0
  %210 = vmatpush1.msra.mxu0 0.0
  %211 = vmatprep.subr.mxu0 0.0
  %212 = vmatpush1.msra.mxu0 0.0
  %213 = vmatprep.subr.mxu0 0.0
  %214 = vmatpush1.msra.mxu0 0.0
  %215 = vmatprep.subr.mxu0 0.0
  %216 = vmatpush1.msra.mxu0 0.0
  %217 = vmatprep.subr.mxu0 0.0
  %218 = vmatpush1.msra.mxu0 0.0
  %219 = vmatprep.subr.mxu0 0.0
  %220 = vmatpush1.msra.mxu0 0.0
  %221 = vmatprep.subr.mxu0 0.0
  %222 = vmatpush1.msra.mxu0 0.0
  %223 = vmatprep.subr.mxu0 0.0
  %224 = vmatpush1.msra.mxu0 0.0
  %225 = vmatprep.subr.mxu0 0.0
  %226 = vmatpush1.msra.mxu0 0.0
  %227 = vmatprep.subr.mxu0 0.0
  %228 = vmatpush1.msra.mxu0 0.0
  %229 = vmatprep.subr.mxu0 0.0
  %230 = vmatpush1.msra.mxu0 0.0
  %231 = vmatprep.subr.mxu0 0.0
  %232 = vmatpush1.msra.mxu0 0.0
  %233 = vmatprep.subr.mxu0 0.0
  %234 = vmatpush1.msra.mxu0 0.0
  %235 = vmatprep.subr.mxu0 0.0
  %236 = vmatpush1.msra.mxu0 0.0
  %237 = vmatprep.subr.mxu0 0.0
  %238 = vmatpush1.msra.mxu0 0.0
  %239 = vmatprep.subr.mxu0 0.0
  %240 = vmatpush1.msra.mxu0 0.0
  %241 = vmatprep.subr.mxu0 0.0
  %242 = vmatpush1.msra.mxu0 0.0
  %243 = vmatprep.subr.mxu0 0.0
  %244 = vmatpush1.msra.mxu0 0.0
  %245 = vmatprep.subr.mxu0 0.0
  %246 = vmatpush1.msra.mxu0 0.0
  %247 = vmatprep.subr.mxu0 0.0
  %248 = vmatpush1.msra.mxu0 0.0
  %249 = vmatprep.subr.mxu0 0.0
  %250 = vmatpush1.msra.mxu0 0.0
  %251 = vmatprep.subr.mxu0 0.0
  %252 = vmatpush1.msra.mxu0 0.0
  %253 = vmatprep.subr.mxu0 0.0
  %254 = vmatpush1.msra.mxu0 0.0
  %255 = vmatprep.subr.mxu0 0.0
  %256 = vmatpush1.msra.mxu0 0.0
  %257 = vmatprep.subr.mxu0 0.0
  %258 = vmatpush1.msra.mxu0 0.0
  %259 = vmatprep.subr.mxu0 0.0
  %260 = vmatpush1.msra.mxu0 0.0
  %261 = vmatprep.subr.mxu0 0.0
  %262 = vmatpush1.msra.mxu0 0.0
  %263 = vmatprep.subr.mxu0 0.0
  %264 = vmatpush1.msra.mxu0 0.0
  %265 = vmatprep.subr.mxu0 0.0
  %266 = vmatpush1.msra.mxu0 0.0
  %267 = vmatprep.mubr.f32.mxu0 0.0
  %268 = vmatmul.mubr.f32.gmra.mrb[0].mxu0 %v152
  %v269 = vpop.f32.mrb[0].mxu0
  %v270 = vadd.f32 %v148, %v269
  %v271 = vpop.f32.mrb[0].mxu0
  %272 = vmatprep.mubr.f32.mxu0 0.0
  %273 = vmatmul.mubr.f32.gmra.mrb[0].mxu0 %v155
  %v274 = vpop.f32.mrb[0].mxu0
  %v275 = vadd.f32 %v148, %v274
  %v276 = vpop.f32.mrb[0].mxu0
  %277 = vmatprep.mubr.f32.mxu0 0.0
  %278 = vmatmul.mubr.f32.gmra.mrb[0].mxu0 %v158
  %v279 = vpop.f32.mrb[0].mxu0
  %v280 = vadd.f32 %v148, %v279
  %v281 = vpop.f32.mrb[0].mxu0
  %282 = vmatprep.mubr.f32.mxu0 0.0
  %283 = vmatmul.mubr.f32.gmra.mrb[0].mxu0 %v161
  %v284 = vpop.f32.mrb[0].mxu0
  %v285 = vadd.f32 %v148, %v284
  %v286 = vpop.f32.mrb[0].mxu0
  %287 = vmatprep.mubr.f32.mxu0 0.0
  %288 = vmatmul.mubr.f32.gmra.mrb[0].mxu0 %v164
  %v289 = vpop.f32.mrb[0].mxu0
  %v290 = vadd.f32 %v148, %v289
  %v291 = vpop.f32.mrb[0].mxu0
  %292 = vmatprep.mubr.f32.mxu0 0.0
  %293 = vmatmul.mubr.f32.gmra.mrb[0].mxu0 %v167
  %v294 = vpop.f32.mrb[0].mxu0
  %v295 = vadd.f32 %v148, %v294
  %v296 = vpop.f32.mrb[0].mxu0
  %297 = vmatprep.mubr.f32.mxu0 0.0
  %298 = vmatmul.mubr.f32.gmra.mrb[0].mxu0 %v170
  %v299 = vpop.f32.mrb[0].mxu0
  %v300 = vadd.f32 %v148, %v299
  %v301 = vpop.f32.mrb[0].mxu0
  %302 = vmatprep.mubr.f32.mxu0 0.0
  %303 = vmatmul.mubr.f32.gmra.mrb[0].mxu0 %v173
  %v304 = vpop.f32.mrb[0].mxu0
  %v305 = vadd.f32 %v148, %v304
  %v306 = vpop.f32.mrb[0].mxu0
  %307 = vmatprep.mubr.f32.mxu0 0.0
  %308 = vmatmul.mubr.f32.gmra.mrb[0].mxu0 %v176
  %v309 = vpop.f32.mrb[0].mxu0
  %v310 = vadd.f32 %v148, %v309
  %v311 = vpop.f32.mrb[0].mxu0
  %312 = vmatprep.mubr.f32.mxu0 0.0
  %313 = vmatmul.mubr.f32.gmra.mrb[0].mxu0 %v179
  %v314 = vpop.f32.mrb[0].mxu0
  %v315 = vadd.f32 %v148, %v314
  %v316 = vpop.f32.mrb[0].mxu0
  %317 = vmatprep.mubr.f32.mxu0 0.0
  %318 = vmatmul.mubr.f32.gmra.mrb[0].mxu0 %v182
  %v319 = vpop.f32.mrb[0].mxu0
  %v320 = vadd.f32 %v148, %v319
  %v321 = vpop.f32.mrb[0].mxu0
  %322 = vmatprep.mubr.f32.mxu0 0.0
  %323 = vmatmul.mubr.f32.gmra.mrb[0].mxu0 %v185
  %v324 = vpop.f32.mrb[0].mxu0
  %v325 = vadd.f32 %v148, %v324
  %v326 = vpop.f32.mrb[0].mxu0
  %327 = vmatprep.mubr.f32.mxu0 0.0
  %328 = vmatmul.mubr.f32.gmra.mrb[0].mxu0 %v188
  %v329 = vpop.f32.mrb[0].mxu0
  %v330 = vadd.f32 %v148, %v329
  %v331 = vpop.f32.mrb[0].mxu0
  %332 = vmatprep.mubr.f32.mxu0 0.0
  %333 = vmatmul.mubr.f32.gmra.mrb[0].mxu0 %v191
  %v334 = vpop.f32.mrb[0].mxu0
  %v335 = vadd.f32 %v148, %v334
  %v336 = vpop.f32.mrb[0].mxu0
  %337 = vmatprep.mubr.f32.mxu0 0.0
  %338 = vmatmul.mubr.f32.gmra.mrb[0].mxu0 %v194
  %v339 = vpop.f32.mrb[0].mxu0
  %v340 = vadd.f32 %v148, %v339
  %v341 = vpop.f32.mrb[0].mxu0
  %342 = vmatprep.mubr.f32.mxu0 0.0
  %343 = vmatmul.mubr.f32.gmra.mrb[0].mxu0 %v197
  %v344 = vpop.f32.mrb[0].mxu0
  %v345 = vadd.f32 %v148, %v344
  %v346 = vpop.f32.mrb[0].mxu0
  %347 = vdwg.mxu0
  %v348 = vmax.f32 %v270, 0.0
  %v349 = vmax.f32 %v275, 0.0
  %v350 = vmax.f32 %v280, 0.0
  %v351 = vmax.f32 %v285, 0.0
  %v352 = vmax.f32 %v290, 0.0
  %v353 = vmax.f32 %v295, 0.0
  %v354 = vmax.f32 %v300, 0.0
  %v355 = vmax.f32 %v305, 0.0
  %v356 = vmax.f32 %v310, 0.0
  %v357 = vmax.f32 %v315, 0.0
  %v358 = vmax.f32 %v320, 0.0
  %v359 = vmax.f32 %v325, 0.0
  %v360 = vmax.f32 %v330, 0.0
  %v361 = vmax.f32 %v335, 0.0
  %v362 = vmax.f32 %v340, 0.0
  %v363 = vmax.f32 %v345, 0.0
  %v364 = vld [vmem:[%s15] sm:$0xff]
  %v365 = vld [vmem:[%s15 + $0x8] sm:$0xff]
  %v366 = vld [vmem:[%s15 + $0x10] sm:$0xff]
  %v367 = vld [vmem:[%s15 + $0x18] sm:$0xff]
  %vm368 = vcmask 261120
  %v370 = vsel %vm368, %v348, 0
  %v373 = vsel %vm368, %v349, 0
  %v376 = vsel %vm368, %v350, 0
  %v379 = vsel %vm368, %v351, 0
  %v382 = vsel %vm368, %v352, 0
  %v385 = vsel %vm368, %v353, 0
  %v388 = vsel %vm368, %v354, 0
  %v391 = vsel %vm368, %v355, 0
  %v394 = vsel %vm368, %v356, 0
  %v397 = vsel %vm368, %v357, 0
  %v400 = vsel %vm368, %v358, 0
  %v403 = vsel %vm368, %v359, 0
  %v406 = vsel %vm368, %v360, 0
  %v409 = vsel %vm368, %v361, 0
  %v412 = vsel %vm368, %v362, 0
  %v415 = vsel %vm368, %v363, 0
  %417 = vmatprep.subr.mxu0 0.0
  %418 = vmatpush1.msra.mxu0 %v364
  %419 = vmatprep.subr.mxu0 0.0
  %420 = vmatpush1.msra.mxu0 %v365
  %421 = vmatprep.subr.mxu0 0.0
  %422 = vmatpush1.msra.mxu0 %v366
  %423 = vmatprep.subr.mxu0 0.0
  %424 = vmatpush1.msra.mxu0 %v367
  %425 = vmatprep.subr.mxu0 0.0
  %426 = vmatpush1.msra.mxu0 0.0
  %427 = vmatprep.subr.mxu0 0.0
  %428 = vmatpush1.msra.mxu0 0.0
  %429 = vmatprep.subr.mxu0 0.0
  %430 = vmatpush1.msra.mxu0 0.0
  %431 = vmatprep.subr.mxu0 0.0
  %432 = vmatpush1.msra.mxu0 0.0
  %433 = vmatprep.subr.mxu0 0.0
  %434 = vmatpush1.msra.mxu0 0.0
  %435 = vmatprep.subr.mxu0 0.0
  %436 = vmatpush1.msra.mxu0 0.0
  %437 = vmatprep.subr.mxu0 0.0
  %438 = vmatpush1.msra.mxu0 0.0
  %439 = vmatprep.subr.mxu0 0.0
  %440 = vmatpush1.msra.mxu0 0.0
  %441 = vmatprep.subr.mxu0 0.0
  %442 = vmatpush1.msra.mxu0 0.0
  %443 = vmatprep.subr.mxu0 0.0
  %444 = vmatpush1.msra.mxu0 0.0
  %445 = vmatprep.subr.mxu0 0.0
  %446 = vmatpush1.msra.mxu0 0.0
  %447 = vmatprep.subr.mxu0 0.0
  %448 = vmatpush1.msra.mxu0 0.0
  %449 = vmatprep.subr.mxu0 0.0
  %450 = vmatpush1.msra.mxu0 0.0
  %451 = vmatprep.subr.mxu0 0.0
  %452 = vmatpush1.msra.mxu0 0.0
  %453 = vmatprep.subr.mxu0 0.0
  %454 = vmatpush1.msra.mxu0 0.0
  %455 = vmatprep.subr.mxu0 0.0
  %456 = vmatpush1.msra.mxu0 0.0
  %457 = vmatprep.subr.mxu0 0.0
  %458 = vmatpush1.msra.mxu0 0.0
  %459 = vmatprep.subr.mxu0 0.0
  %460 = vmatpush1.msra.mxu0 0.0
  %461 = vmatprep.subr.mxu0 0.0
  %462 = vmatpush1.msra.mxu0 0.0
  %463 = vmatprep.subr.mxu0 0.0
  %464 = vmatpush1.msra.mxu0 0.0
  %465 = vmatprep.subr.mxu0 0.0
  %466 = vmatpush1.msra.mxu0 0.0
  %467 = vmatprep.subr.mxu0 0.0
  %468 = vmatpush1.msra.mxu0 0.0
  %469 = vmatprep.subr.mxu0 0.0
  %470 = vmatpush1.msra.mxu0 0.0
  %471 = vmatprep.subr.mxu0 0.0
  %472 = vmatpush1.msra.mxu0 0.0
  %473 = vmatprep.subr.mxu0 0.0
  %474 = vmatpush1.msra.mxu0 0.0
  %475 = vmatprep.subr.mxu0 0.0
  %476 = vmatpush1.msra.mxu0 0.0
  %477 = vmatprep.subr.mxu0 0.0
  %478 = vmatpush1.msra.mxu0 0.0
  %479 = vmatprep.subr.mxu0 0.0
  %480 = vmatpush1.msra.mxu0 0.0
  %481 = vmatprep.mubr.f32.mxu0 0.0
  %482 = vmatmul.mubr.f32.gmra.mrb[0].mxu0 %v370
  %v483 = vpop.f32.mrb[0].mxu0
  %v484 = vadd.f32 0.0, %v483
  %v485 = vpop.f32.mrb[0].mxu0
  %486 = vmatprep.mubr.f32.mxu0 0.0
  %487 = vmatmul.mubr.f32.gmra.mrb[0].mxu0 %v373
  %v488 = vpop.f32.mrb[0].mxu0
  %v489 = vadd.f32 0.0, %v488
  %v490 = vpop.f32.mrb[0].mxu0
  %491 = vmatprep.mubr.f32.mxu0 0.0
  %492 = vmatmul.mubr.f32.gmra.mrb[0].mxu0 %v376
  %v493 = vpop.f32.mrb[0].mxu0
  %v494 = vadd.f32 0.0, %v493
  %v495 = vpop.f32.mrb[0].mxu0
  %496 = vmatprep.mubr.f32.mxu0 0.0
  %497 = vmatmul.mubr.f32.gmra.mrb[0].mxu0 %v379
  %v498 = vpop.f32.mrb[0].mxu0
  %v499 = vadd.f32 0.0, %v498
  %v500 = vpop.f32.mrb[0].mxu0
  %501 = vmatprep.mubr.f32.mxu0 0.0
  %502 = vmatmul.mubr.f32.gmra.mrb[0].mxu0 %v382
  %v503 = vpop.f32.mrb[0].mxu0
  %v504 = vadd.f32 0.0, %v503
  %v505 = vpop.f32.mrb[0].mxu0
  %506 = vmatprep.mubr.f32.mxu0 0.0
  %507 = vmatmul.mubr.f32.gmra.mrb[0].mxu0 %v385
  %v508 = vpop.f32.mrb[0].mxu0
  %v509 = vadd.f32 0.0, %v508
  %v510 = vpop.f32.mrb[0].mxu0
  %511 = vmatprep.mubr.f32.mxu0 0.0
  %512 = vmatmul.mubr.f32.gmra.mrb[0].mxu0 %v388
  %v513 = vpop.f32.mrb[0].mxu0
  %v514 = vadd.f32 0.0, %v513
  %v515 = vpop.f32.mrb[0].mxu0
  %516 = vmatprep.mubr.f32.mxu0 0.0
  %517 = vmatmul.mubr.f32.gmra.mrb[0].mxu0 %v391
  %v518 = vpop.f32.mrb[0].mxu0
  %v519 = vadd.f32 0.0, %v518
  %v520 = vpop.f32.mrb[0].mxu0
  %521 = vmatprep.mubr.f32.mxu0 0.0
  %522 = vmatmul.mubr.f32.gmra.mrb[0].mxu0 %v394
  %v523 = vpop.f32.mrb[0].mxu0
  %v524 = vadd.f32 0.0, %v523
  %v525 = vpop.f32.mrb[0].mxu0
  %526 = vmatprep.mubr.f32.mxu0 0.0
  %527 = vmatmul.mubr.f32.gmra.mrb[0].mxu0 %v397
  %v528 = vpop.f32.mrb[0].mxu0
  %v529 = vadd.f32 0.0, %v528
  %v530 = vpop.f32.mrb[0].mxu0
  %531 = vmatprep.mubr.f32.mxu0 0.0
  %532 = vmatmul.mubr.f32.gmra.mrb[0].mxu0 %v400
  %v533 = vpop.f32.mrb[0].mxu0
  %v534 = vadd.f32 0.0, %v533
  %v535 = vpop.f32.mrb[0].mxu0
  %536 = vmatprep.mubr.f32.mxu0 0.0
  %537 = vmatmul.mubr.f32.gmra.mrb[0].mxu0 %v403
  %v538 = vpop.f32.mrb[0].mxu0
  %v539 = vadd.f32 0.0, %v538
  %v540 = vpop.f32.mrb[0].mxu0
  %541 = vmatprep.mubr.f32.mxu0 0.0
  %542 = vmatmul.mubr.f32.gmra.mrb[0].mxu0 %v406
  %v543 = vpop.f32.mrb[0].mxu0
  %v544 = vadd.f32 0.0, %v543
  %v545 = vpop.f32.mrb[0].mxu0
  %546 = vmatprep.mubr.f32.mxu0 0.0
  %547 = vmatmul.mubr.f32.gmra.mrb[0].mxu0 %v409
  %v548 = vpop.f32.mrb[0].mxu0
  %v549 = vadd.f32 0.0, %v548
  %v550 = vpop.f32.mrb[0].mxu0
  %551 = vmatprep.mubr.f32.mxu0 0.0
  %552 = vmatmul.mubr.f32.gmra.mrb[0].mxu0 %v412
  %v553 = vpop.f32.mrb[0].mxu0
  %v554 = vadd.f32 0.0, %v553
  %v555 = vpop.f32.mrb[0].mxu0
  %556 = vmatprep.mubr.f32.mxu0 0.0
  %557 = vmatmul.mubr.f32.gmra.mrb[0].mxu0 %v415
  %v558 = vpop.f32.mrb[0].mxu0
  %v559 = vadd.f32 0.0, %v558
  %v560 = vpop.f32.mrb[0].mxu0
  %561 = vdwg.mxu0
  %v562 = vsel %vm368, %v484, 0.0
  %v563 = vrot.slane %v562, 4
  %v564 = vadd.f32 %v562, %v563
  %v565 = vrot.slane %v564, 2
  %v566 = vadd.f32 %v564, %v565
  %v567 = vrot.slane %v566, 1
  %v568 = vadd.f32 %v566, %v567
  %v569 = vsel %vm368, %v489, 0.0
  %v570 = vrot.slane %v569, 4
  %v571 = vadd.f32 %v569, %v570
  %v572 = vrot.slane %v571, 2
  %v573 = vadd.f32 %v571, %v572
  %v574 = vrot.slane %v573, 1
  %v575 = vadd.f32 %v573, %v574
  %v576 = vsel %vm368, %v494, 0.0
  %v577 = vrot.slane %v576, 4
  %v578 = vadd.f32 %v576, %v577
  %v579 = vrot.slane %v578, 2
  %v580 = vadd.f32 %v578, %v579
  %v581 = vrot.slane %v580, 1
  %v582 = vadd.f32 %v580, %v581
  %v583 = vsel %vm368, %v499, 0.0
  %v584 = vrot.slane %v583, 4
  %v585 = vadd.f32 %v583, %v584
  %v586 = vrot.slane %v585, 2
  %v587 = vadd.f32 %v585, %v586
  %v588 = vrot.slane %v587, 1
  %v589 = vadd.f32 %v587, %v588
  %v590 = vsel %vm368, %v504, 0.0
  %v591 = vrot.slane %v590, 4
  %v592 = vadd.f32 %v590, %v591
  %v593 = vrot.slane %v592, 2
  %v594 = vadd.f32 %v592, %v593
  %v595 = vrot.slane %v594, 1
  %v596 = vadd.f32 %v594, %v595
  %v597 = vsel %vm368, %v509, 0.0
  %v598 = vrot.slane %v597, 4
  %v599 = vadd.f32 %v597, %v598
  %v600 = vrot.slane %v599, 2
  %v601 = vadd.f32 %v599, %v600
  %v602 = vrot.slane %v601, 1
  %v603 = vadd.f32 %v601, %v602
  %v604 = vsel %vm368, %v514, 0.0
  %v605 = vrot.slane %v604, 4
  %v606 = vadd.f32 %v604, %v605
  %v607 = vrot.slane %v606, 2
  %v608 = vadd.f32 %v606, %v607
  %v609 = vrot.slane %v608, 1
  %v610 = vadd.f32 %v608, %v609
  %v611 = vsel %vm368, %v519, 0.0
  %v612 = vrot.slane %v611, 4
  %v613 = vadd.f32 %v611, %v612
  %v614 = vrot.slane %v613, 2
  %v615 = vadd.f32 %v613, %v614
  %v616 = vrot.slane %v615, 1
  %v617 = vadd.f32 %v615, %v616
  %v618 = vsel %vm368, %v524, 0.0
  %v619 = vrot.slane %v618, 4
  %v620 = vadd.f32 %v618, %v619
  %v621 = vrot.slane %v620, 2
  %v622 = vadd.f32 %v620, %v621
  %v623 = vrot.slane %v622, 1
  %v624 = vadd.f32 %v622, %v623
  %v625 = vsel %vm368, %v529, 0.0
  %v626 = vrot.slane %v625, 4
  %v627 = vadd.f32 %v625, %v626
  %v628 = vrot.slane %v627, 2
  %v629 = vadd.f32 %v627, %v628
  %v630 = vrot.slane %v629, 1
  %v631 = vadd.f32 %v629, %v630
  %v632 = vsel %vm368, %v534, 0.0
  %v633 = vrot.slane %v632, 4
  %v634 = vadd.f32 %v632, %v633
  %v635 = vrot.slane %v634, 2
  %v636 = vadd.f32 %v634, %v635
  %v637 = vrot.slane %v636, 1
  %v638 = vadd.f32 %v636, %v637
  %v639 = vsel %vm368, %v539, 0.0
  %v640 = vrot.slane %v639, 4
  %v641 = vadd.f32 %v639, %v640
  %v642 = vrot.slane %v641, 2
  %v643 = vadd.f32 %v641, %v642
  %v644 = vrot.slane %v643, 1
  %v645 = vadd.f32 %v643, %v644
  %v646 = vsel %vm368, %v544, 0.0
  %v647 = vrot.slane %v646, 4
  %v648 = vadd.f32 %v646, %v647
  %v649 = vrot.slane %v648, 2
  %v650 = vadd.f32 %v648, %v649
  %v651 = vrot.slane %v650, 1
  %v652 = vadd.f32 %v650, %v651
  %v653 = vsel %vm368, %v549, 0.0
  %v654 = vrot.slane %v653, 4
  %v655 = vadd.f32 %v653, %v654
  %v656 = vrot.slane %v655, 2
  %v657 = vadd.f32 %v655, %v656
  %v658 = vrot.slane %v657, 1
  %v659 = vadd.f32 %v657, %v658
  %v660 = vsel %vm368, %v554, 0.0
  %v661 = vrot.slane %v660, 4
  %v662 = vadd.f32 %v660, %v661
  %v663 = vrot.slane %v662, 2
  %v664 = vadd.f32 %v662, %v663
  %v665 = vrot.slane %v664, 1
  %v666 = vadd.f32 %v664, %v665
  %v667 = vsel %vm368, %v559, 0.0
  %v668 = vrot.slane %v667, 4
  %v669 = vadd.f32 %v667, %v668
  %v670 = vrot.slane %v669, 2
  %v671 = vadd.f32 %v669, %v670
  %v672 = vrot.slane %v671, 1
  %v673 = vadd.f32 %v671, %v672
  %v674 = vld [vmem:[%s17] sm:$0x1]
  %v675 = vmul.f32 %v674, 8.0
  %v677 = vlaneseq
  %v678 = vshrl.u32 %v677, 7
  %v679 = vsub.s32 0, %v678
  %v680 = vrot.slane %v675, %v679
  %v682 = vadd.f32 %v568, %v680
  %v683 = vadd.f32 %v575, %v680
  %v684 = vadd.f32 %v582, %v680
  %v685 = vadd.f32 %v589, %v680
  %v686 = vadd.f32 %v596, %v680
  %v687 = vadd.f32 %v603, %v680
  %v688 = vadd.f32 %v610, %v680
  %v689 = vadd.f32 %v617, %v680
  %v690 = vadd.f32 %v624, %v680
  %v691 = vadd.f32 %v631, %v680
  %v692 = vadd.f32 %v638, %v680
  %v693 = vadd.f32 %v645, %v680
  %v694 = vadd.f32 %v652, %v680
  %v695 = vadd.f32 %v659, %v680
  %v696 = vadd.f32 %v666, %v680
  %v697 = vadd.f32 %v673, %v680
  %v698 = vld [vmem:[%s19] sm:$0xff]
  %v699 = vld [vmem:[%s19 + $0x8] sm:$0xff]
  %v700 = vld [vmem:[%s19 + $0x10] sm:$0xff]
  %v701 = vld [vmem:[%s19 + $0x18] sm:$0xff]
  %v702 = vld [vmem:[%s21] sm:$0x1]
  %v704 = vlaneseq
  %v705 = vshrl.u32 %v704, 7
  %v706 = vsub.s32 0, %v705
  %v707 = vrot.slane %v702, %v706
  %v725 = vrot.slane %v683, 7
  %vm726 = vcmask 1041409
  %v727 = vsel %vm726, %v725, %v682
  %v728 = vrot.slane %v684, 6
  %vm729 = vcmask 1042434
  %v730 = vsel %vm729, %v728, %v727
  %v731 = vrot.slane %v685, 5
  %vm732 = vcmask 1043459
  %v733 = vsel %vm732, %v731, %v730
  %v734 = vrot.slane %v686, 4
  %vm735 = vcmask 1044484
  %v736 = vsel %vm735, %v734, %v733
  %v737 = vrot.slane %v687, 3
  %vm738 = vcmask 1045509
  %v739 = vsel %vm738, %v737, %v736
  %v740 = vrot.slane %v688, 2
  %vm741 = vcmask 1046534
  %v742 = vsel %vm741, %v740, %v739
  %v743 = vrot.slane %v689, 1
  %vm744 = vcmask 1047559
  %v745 = vsel %vm744, %v743, %v742
  %v746 = vrot.slane %v691, 7
  %v747 = vsel %vm726, %v746, %v690
  %v748 = vrot.slane %v692, 6
  %v749 = vsel %vm729, %v748, %v747
  %v750 = vrot.slane %v693, 5
  %v751 = vsel %vm732, %v750, %v749
  %v752 = vrot.slane %v694, 4
  %v753 = vsel %vm735, %v752, %v751
  %v754 = vrot.slane %v695, 3
  %v755 = vsel %vm738, %v754, %v753
  %v756 = vrot.slane %v696, 2
  %v757 = vsel %vm741, %v756, %v755
  %v758 = vrot.slane %v697, 1
  %v759 = vsel %vm744, %v758, %v757
  %v760 = vsel %vm368, %v745, 0
  %v762 = vsel %vm368, %v759, 0
  %764 = vmatprep.subr.mxu0 0.0
  %765 = vmatpush1.msra.mxu0 %v698
  %766 = vmatprep.subr.mxu0 0.0
  %767 = vmatpush1.msra.mxu0 %v699
  %768 = vmatprep.subr.mxu0 0.0
  %769 = vmatpush1.msra.mxu0 %v700
  %770 = vmatprep.subr.mxu0 0.0
  %771 = vmatpush1.msra.mxu0 %v701
  %772 = vmatprep.subr.mxu0 0.0
  %773 = vmatpush1.msra.mxu0 0.0
  %774 = vmatprep.subr.mxu0 0.0
  %775 = vmatpush1.msra.mxu0 0.0
  %776 = vmatprep.subr.mxu0 0.0
  %777 = vmatpush1.msra.mxu0 0.0
  %778 = vmatprep.subr.mxu0 0.0
  %779 = vmatpush1.msra.mxu0 0.0
  %780 = vmatprep.subr.mxu0 0.0
  %781 = vmatpush1.msra.mxu0 0.0
  %782 = vmatprep.subr.mxu0 0.0
  %783 = vmatpush1.msra.mxu0 0.0
  %784 = vmatprep.subr.mxu0 0.0
  %785 = vmatpush1.msra.mxu0 0.0
  %786 = vmatprep.subr.mxu0 0.0
  %787 = vmatpush1.msra.mxu0 0.0
  %788 = vmatprep.subr.mxu0 0.0
  %789 = vmatpush1.msra.mxu0 0.0
  %790 = vmatprep.subr.mxu0 0.0
  %791 = vmatpush1.msra.mxu0 0.0
  %792 = vmatprep.subr.mxu0 0.0
  %793 = vmatpush1.msra.mxu0 0.0
  %794 = vmatprep.subr.mxu0 0.0
  %795 = vmatpush1.msra.mxu0 0.0
  %796 = vmatprep.subr.mxu0 0.0
  %797 = vmatpush1.msra.mxu0 0.0
  %798 = vmatprep.subr.mxu0 0.0
  %799 = vmatpush1.msra.mxu0 0.0
  %800 = vmatprep.subr.mxu0 0.0
  %801 = vmatpush1.msra.mxu0 0.0
  %802 = vmatprep.subr.mxu0 0.0
  %803 = vmatpush1.msra.mxu0 0.0
  %804 = vmatprep.subr.mxu0 0.0
  %805 = vmatpush1.msra.mxu0 0.0
  %806 = vmatprep.subr.mxu0 0.0
  %807 = vmatpush1.msra.mxu0 0.0
  %808 = vmatprep.subr.mxu0 0.0
  %809 = vmatpush1.msra.mxu0 0.0
  %810 = vmatprep.subr.mxu0 0.0
  %811 = vmatpush1.msra.mxu0 0.0
  %812 = vmatprep.subr.mxu0 0.0
  %813 = vmatpush1.msra.mxu0 0.0
  %814 = vmatprep.subr.mxu0 0.0
  %815 = vmatpush1.msra.mxu0 0.0
  %816 = vmatprep.subr.mxu0 0.0
  %817 = vmatpush1.msra.mxu0 0.0
  %818 = vmatprep.subr.mxu0 0.0
  %819 = vmatpush1.msra.mxu0 0.0
  %820 = vmatprep.subr.mxu0 0.0
  %821 = vmatpush1.msra.mxu0 0.0
  %822 = vmatprep.subr.mxu0 0.0
  %823 = vmatpush1.msra.mxu0 0.0
  %824 = vmatprep.subr.mxu0 0.0
  %825 = vmatpush1.msra.mxu0 0.0
  %826 = vmatprep.subr.mxu0 0.0
  %827 = vmatpush1.msra.mxu0 0.0
  %828 = vmatprep.mubr.f32.mxu0 0.0
  %829 = vmatmul.mubr.f32.gmra.mrb[0].mxu0 %v760
  %v830 = vpop.f32.mrb[0].mxu0
  %v831 = vadd.f32 %v707, %v830
  %v832 = vpop.f32.mrb[0].mxu0
  %833 = vmatprep.mubr.f32.mxu0 0.0
  %834 = vmatmul.mubr.f32.gmra.mrb[0].mxu0 %v762
  %v835 = vpop.f32.mrb[0].mxu0
  %v836 = vadd.f32 %v707, %v835
  %v837 = vpop.f32.mrb[0].mxu0
  %838 = vdwg.mxu0
  %v839 = vmax.f32 %v831, 0.0
  %v840 = vmax.f32 %v836, 0.0
  %v841 = vld [vmem:[%s23] sm:$0xff]
  %v842 = vld [vmem:[%s23 + $0x8] sm:$0xff]
  %v843 = vld [vmem:[%s23 + $0x10] sm:$0xff]
  %v844 = vld [vmem:[%s23 + $0x18] sm:$0xff]
  %v845 = vld [vmem:[%s25] sm:$0x1]
  %v847 = vlaneseq
  %v848 = vshrl.u32 %v847, 7
  %v849 = vsub.s32 0, %v848
  %v850 = vrot.slane %v845, %v849
  %v853 = vsel %vm368, %v839, 0
  %v856 = vsel %vm368, %v840, 0
  %858 = vmatprep.subr.mxu0 0.0
  %859 = vmatpush1.msra.mxu0 %v841
  %860 = vmatprep.subr.mxu0 0.0
  %861 = vmatpush1.msra.mxu0 %v842
  %862 = vmatprep.subr.mxu0 0.0
  %863 = vmatpush1.msra.mxu0 %v843
  %864 = vmatprep.subr.mxu0 0.0
  %865 = vmatpush1.msra.mxu0 %v844
  %866 = vmatprep.subr.mxu0 0.0
  %867 = vmatpush1.msra.mxu0 0.0
  %868 = vmatprep.subr.mxu0 0.0
  %869 = vmatpush1.msra.mxu0 0.0
  %870 = vmatprep.subr.mxu0 0.0
  %871 = vmatpush1.msra.mxu0 0.0
  %872 = vmatprep.subr.mxu0 0.0
  %873 = vmatpush1.msra.mxu0 0.0
  %874 = vmatprep.subr.mxu0 0.0
  %875 = vmatpush1.msra.mxu0 0.0
  %876 = vmatprep.subr.mxu0 0.0
  %877 = vmatpush1.msra.mxu0 0.0
  %878 = vmatprep.subr.mxu0 0.0
  %879 = vmatpush1.msra.mxu0 0.0
  %880 = vmatprep.subr.mxu0 0.0
  %881 = vmatpush1.msra.mxu0 0.0
  %882 = vmatprep.subr.mxu0 0.0
  %883 = vmatpush1.msra.mxu0 0.0
  %884 = vmatprep.subr.mxu0 0.0
  %885 = vmatpush1.msra.mxu0 0.0
  %886 = vmatprep.subr.mxu0 0.0
  %887 = vmatpush1.msra.mxu0 0.0
  %888 = vmatprep.subr.mxu0 0.0
  %889 = vmatpush1.msra.mxu0 0.0
  %890 = vmatprep.subr.mxu0 0.0
  %891 = vmatpush1.msra.mxu0 0.0
  %892 = vmatprep.subr.mxu0 0.0
  %893 = vmatpush1.msra.mxu0 0.0
  %894 = vmatprep.subr.mxu0 0.0
  %895 = vmatpush1.msra.mxu0 0.0
  %896 = vmatprep.subr.mxu0 0.0
  %897 = vmatpush1.msra.mxu0 0.0
  %898 = vmatprep.subr.mxu0 0.0
  %899 = vmatpush1.msra.mxu0 0.0
  %900 = vmatprep.subr.mxu0 0.0
  %901 = vmatpush1.msra.mxu0 0.0
  %902 = vmatprep.subr.mxu0 0.0
  %903 = vmatpush1.msra.mxu0 0.0
  %904 = vmatprep.subr.mxu0 0.0
  %905 = vmatpush1.msra.mxu0 0.0
  %906 = vmatprep.subr.mxu0 0.0
  %907 = vmatpush1.msra.mxu0 0.0
  %908 = vmatprep.subr.mxu0 0.0
  %909 = vmatpush1.msra.mxu0 0.0
  %910 = vmatprep.subr.mxu0 0.0
  %911 = vmatpush1.msra.mxu0 0.0
  %912 = vmatprep.subr.mxu0 0.0
  %913 = vmatpush1.msra.mxu0 0.0
  %914 = vmatprep.subr.mxu0 0.0
  %915 = vmatpush1.msra.mxu0 0.0
  %916 = vmatprep.subr.mxu0 0.0
  %917 = vmatpush1.msra.mxu0 0.0
  %918 = vmatprep.subr.mxu0 0.0
  %919 = vmatpush1.msra.mxu0 0.0
  %920 = vmatprep.subr.mxu0 0.0
  %921 = vmatpush1.msra.mxu0 0.0
  %922 = vmatprep.mubr.f32.mxu0 0.0
  %923 = vmatmul.mubr.f32.gmra.mrb[0].mxu0 %v853
  %v924 = vpop.f32.mrb[0].mxu0
  %v925 = vadd.f32 %v850, %v924
  %v926 = vpop.f32.mrb[0].mxu0
  %927 = vmatprep.mubr.f32.mxu0 0.0
  %928 = vmatmul.mubr.f32.gmra.mrb[0].mxu0 %v856
  %v929 = vpop.f32.mrb[0].mxu0
  %v930 = vadd.f32 %v850, %v929
  %v931 = vpop.f32.mrb[0].mxu0
  %932 = vdwg.mxu0
  %v933 = vld [vmem:[%s3] sm:$0xff]
  %v934 = vld [vmem:[%s3 + $0x8] sm:$0xff]
  %v935 = vld [vmem:[%s27] sm:$0xf]
  %v936 = vld [vmem:[%s29] sm:$0xff]
  %v937 = vld [vmem:[%s29 + $0x8] sm:$0xff]
  %v938 = vld [vmem:[%s29 + $0x10] sm:$0xff]
  %v939 = vld [vmem:[%s29 + $0x18] sm:$0xff]
  %v941 = vsel %vm368, %v925, 0
  %v944 = vsel %vm368, %v930, 0
  %946 = vmatprep.subr.mxu0 0.0
  %947 = vmatpush1.msra.mxu0 %v936
  %948 = vmatprep.subr.mxu0 0.0
  %949 = vmatpush1.msra.mxu0 %v937
  %950 = vmatprep.subr.mxu0 0.0
  %951 = vmatpush1.msra.mxu0 %v938
  %952 = vmatprep.subr.mxu0 0.0
  %953 = vmatpush1.msra.mxu0 %v939
  %954 = vmatprep.subr.mxu0 0.0
  %955 = vmatpush1.msra.mxu0 0.0
  %956 = vmatprep.subr.mxu0 0.0
  %957 = vmatpush1.msra.mxu0 0.0
  %958 = vmatprep.subr.mxu0 0.0
  %959 = vmatpush1.msra.mxu0 0.0
  %960 = vmatprep.subr.mxu0 0.0
  %961 = vmatpush1.msra.mxu0 0.0
  %962 = vmatprep.subr.mxu0 0.0
  %963 = vmatpush1.msra.mxu0 0.0
  %964 = vmatprep.subr.mxu0 0.0
  %965 = vmatpush1.msra.mxu0 0.0
  %966 = vmatprep.subr.mxu0 0.0
  %967 = vmatpush1.msra.mxu0 0.0
  %968 = vmatprep.subr.mxu0 0.0
  %969 = vmatpush1.msra.mxu0 0.0
  %970 = vmatprep.subr.mxu0 0.0
  %971 = vmatpush1.msra.mxu0 0.0
  %972 = vmatprep.subr.mxu0 0.0
  %973 = vmatpush1.msra.mxu0 0.0
  %974 = vmatprep.subr.mxu0 0.0
  %975 = vmatpush1.msra.mxu0 0.0
  %976 = vmatprep.subr.mxu0 0.0
  %977 = vmatpush1.msra.mxu0 0.0
  %978 = vmatprep.subr.mxu0 0.0
  %979 = vmatpush1.msra.mxu0 0.0
  %980 = vmatprep.subr.mxu0 0.0
  %981 = vmatpush1.msra.mxu0 0.0
  %982 = vmatprep.subr.mxu0 0.0
  %983 = vmatpush1.msra.mxu0 0.0
  %984 = vmatprep.subr.mxu0 0.0
  %985 = vmatpush1.msra.mxu0 0.0
  %986 = vmatprep.subr.mxu0 0.0
  %987 = vmatpush1.msra.mxu0 0.0
  %988 = vmatprep.subr.mxu0 0.0
  %989 = vmatpush1.msra.mxu0 0.0
  %990 = vmatprep.subr.mxu0 0.0
  %991 = vmatpush1.msra.mxu0 0.0
  %992 = vmatprep.subr.mxu0 0.0
  %993 = vmatpush1.msra.mxu0 0.0
  %994 = vmatprep.subr.mxu0 0.0
  %995 = vmatpush1.msra.mxu0 0.0
  %996 = vmatprep.subr.mxu0 0.0
  %997 = vmatpush1.msra.mxu0 0.0
  %998 = vmatprep.subr.mxu0 0.0
  %999 = vmatpush1.msra.mxu0 0.0
  %1000 = vmatprep.subr.mxu0 0.0
  %1001 = vmatpush1.msra.mxu0 0.0
  %1002 = vmatprep.subr.mxu0 0.0
  %1003 = vmatpush1.msra.mxu0 0.0
  %1004 = vmatprep.subr.mxu0 0.0
  %1005 = vmatpush1.msra.mxu0 0.0
  %1006 = vmatprep.subr.mxu0 0.0
  %1007 = vmatpush1.msra.mxu0 0.0
  %1008 = vmatprep.subr.mxu0 0.0
  %1009 = vmatpush1.msra.mxu0 0.0
  %1010 = vmatprep.mubr.f32.mxu0 0.0
  %1011 = vmatmul.mubr.f32.gmra.mrb[0].mxu0 %v941
  %v1012 = vpop.f32.mrb[0].mxu0
  %v1013 = vadd.f32 0.0, %v1012
  %v1014 = vpop.f32.mrb[0].mxu0
  %1015 = vmatprep.mubr.f32.mxu0 0.0
  %1016 = vmatmul.mubr.f32.gmra.mrb[0].mxu0 %v944
  %v1017 = vpop.f32.mrb[0].mxu0
  %v1018 = vadd.f32 0.0, %v1017
  %v1019 = vpop.f32.mrb[0].mxu0
  %1020 = vdwg.mxu0
  %v1022 = vsel %vm150, %v933, 0
  %v1025 = vsel %vm150, %v934, 0
  %v1028 = vsel %vm199, %v935, 0
  %1030 = vmatprep.subr.mxu0 0.0
  %1031 = vmatpush1.msra.mxu0 %v1028
  %1032 = vmatprep.subr.mxu0 0.0
  %1033 = vmatpush1.msra.mxu0 0.0
  %1034 = vmatprep.subr.mxu0 0.0
  %1035 = vmatpush1.msra.mxu0 0.0
  %1036 = vmatprep.subr.mxu0 0.0
  %1037 = vmatpush1.msra.mxu0 0.0
  %1038 = vmatprep.subr.mxu0 0.0
  %1039 = vmatpush1.msra.mxu0 0.0
  %1040 = vmatprep.subr.mxu0 0.0
  %1041 = vmatpush1.msra.mxu0 0.0
  %1042 = vmatprep.subr.mxu0 0.0
  %1043 = vmatpush1.msra.mxu0 0.0
  %1044 = vmatprep.subr.mxu0 0.0
  %1045 = vmatpush1.msra.mxu0 0.0
  %1046 = vmatprep.subr.mxu0 0.0
  %1047 = vmatpush1.msra.mxu0 0.0
  %1048 = vmatprep.subr.mxu0 0.0
  %1049 = vmatpush1.msra.mxu0 0.0
  %1050 = vmatprep.subr.mxu0 0.0
  %1051 = vmatpush1.msra.mxu0 0.0
  %1052 = vmatprep.subr.mxu0 0.0
  %1053 = vmatpush1.msra.mxu0 0.0
  %1054 = vmatprep.subr.mxu0 0.0
  %1055 = vmatpush1.msra.mxu0 0.0
  %1056 = vmatprep.subr.mxu0 0.0
  %1057 = vmatpush1.msra.mxu0 0.0
  %1058 = vmatprep.subr.mxu0 0.0
  %1059 = vmatpush1.msra.mxu0 0.0
  %1060 = vmatprep.subr.mxu0 0.0
  %1061 = vmatpush1.msra.mxu0 0.0
  %1062 = vmatprep.subr.mxu0 0.0
  %1063 = vmatpush1.msra.mxu0 0.0
  %1064 = vmatprep.subr.mxu0 0.0
  %1065 = vmatpush1.msra.mxu0 0.0
  %1066 = vmatprep.subr.mxu0 0.0
  %1067 = vmatpush1.msra.mxu0 0.0
  %1068 = vmatprep.subr.mxu0 0.0
  %1069 = vmatpush1.msra.mxu0 0.0
  %1070 = vmatprep.subr.mxu0 0.0
  %1071 = vmatpush1.msra.mxu0 0.0
  %1072 = vmatprep.subr.mxu0 0.0
  %1073 = vmatpush1.msra.mxu0 0.0
  %1074 = vmatprep.subr.mxu0 0.0
  %1075 = vmatpush1.msra.mxu0 0.0
  %1076 = vmatprep.subr.mxu0 0.0
  %1077 = vmatpush1.msra.mxu0 0.0
  %1078 = vmatprep.subr.mxu0 0.0
  %1079 = vmatpush1.msra.mxu0 0.0
  %1080 = vmatprep.subr.mxu0 0.0
  %1081 = vmatpush1.msra.mxu0 0.0
  %1082 = vmatprep.subr.mxu0 0.0
  %1083 = vmatpush1.msra.mxu0 0.0
  %1084 = vmatprep.subr.mxu0 0.0
  %1085 = vmatpush1.msra.mxu0 0.0
  %1086 = vmatprep.subr.mxu0 0.0
  %1087 = vmatpush1.msra.mxu0 0.0
  %1088 = vmatprep.subr.mxu0 0.0
  %1089 = vmatpush1.msra.mxu0 0.0
  %1090 = vmatprep.subr.mxu0 0.0
  %1091 = vmatpush1.msra.mxu0 0.0
  %1092 = vmatprep.subr.mxu0 0.0
  %1093 = vmatpush1.msra.mxu0 0.0
  %1094 = vmatprep.mubr.f32.mxu0 0.0
  %1095 = vmatmul.mubr.f32.gmra.mrb[0].mxu0 %v1022
  %v1096 = vpop.f32.mrb[0].mxu0
  %v1097 = vadd.f32 %v1013, %v1096
  %v1098 = vpop.f32.mrb[0].mxu0
  %1099 = vmatprep.mubr.f32.mxu0 0.0
  %1100 = vmatmul.mubr.f32.gmra.mrb[0].mxu0 %v1025
  %v1101 = vpop.f32.mrb[0].mxu0
  %v1102 = vadd.f32 %v1018, %v1101
  %v1103 = vpop.f32.mrb[0].mxu0
  %1104 = vdwg.mxu0
  %v1105 = vld [vmem:[%s31] sm:$0x1]
  %v1107 = vlaneseq
  %v1108 = vshrl.u32 %v1107, 7
  %v1109 = vsub.s32 0, %v1108
  %v1110 = vrot.slane %v1105, %v1109
  %v1112 = vadd.f32 %v1097, %v1110
  %v1113 = vadd.f32 %v1102, %v1110
  %v1114 = vld [vmem:[%s5] sm:$0xff]
  %v1115 = vld [vmem:[%s5 + $0x8] sm:$0xff]
  %v1116 = vld [vmem:[%s5 + $0x10] sm:$0xff]
  %v1117 = vld [vmem:[%s5 + $0x18] sm:$0xff]
  %v1118 = vld [vmem:[%s5 + $0x20] sm:$0xff]
  %v1119 = vld [vmem:[%s5 + $0x28] sm:$0xff]
  %v1120 = vld [vmem:[%s7] sm:$0xff]
  %v1121 = vld [vmem:[%s7 + $0x8] sm:$0xff]
  %v1122 = vld [vmem:[%s7 + $0x10] sm:$0xff]
  %v1123 = vld [vmem:[%s7 + $0x18] sm:$0xff]
  %v1124 = vld [vmem:[%s7 + $0x20] sm:$0xff]
  %v1125 = vld [vmem:[%s7 + $0x28] sm:$0xff]
  %v1126 = vld [vmem:[%s9] sm:$0xff]
  %v1127 = vld [vmem:[%s9 + $0x8] sm:$0xff]
  %v1128 = vld [vmem:[%s33] sm:$0x1]
  %1130 = vset.pattern.permute.xlu0 0
  %1131 = vperm.xlu0 %1130, %v1114
  %v1132 = vpop.permute.xlu0 %1131
  %1135 = vset.pattern.permute.xlu0 0
  %1136 = vperm.xlu0 %1135, %v1115
  %v1137 = vpop.permute.xlu0 %1136
  %1140 = vset.pattern.permute.xlu0 0
  %1141 = vperm.xlu0 %1140, %v1116
  %v1142 = vpop.permute.xlu0 %1141
  %1145 = vset.pattern.permute.xlu0 0
  %1146 = vperm.xlu0 %1145, %v1117
  %v1147 = vpop.permute.xlu0 %1146
  %1150 = vset.pattern.permute.xlu0 0
  %1151 = vperm.xlu0 %1150, %v1118
  %v1152 = vpop.permute.xlu0 %1151
  %1155 = vset.pattern.permute.xlu0 0
  %1156 = vperm.xlu0 %1155, %v1119
  %v1157 = vpop.permute.xlu0 %1156
  %v1160 = vlaneseq
  %v1161 = vshrl.u32 %v1160, 7
  %v1162 = vsub.s32 0, %v1161
  %v1163 = vrot.slane %v1128, %v1162
  %v1165 = vmul.f32 %v1132, %v1163
  %v1166 = vmul.f32 %v1137, %v1163
  %v1167 = vmul.f32 %v1142, %v1163
  %v1168 = vmul.f32 %v1147, %v1163
  %v1169 = vmul.f32 %v1152, %v1163
  %v1170 = vmul.f32 %v1157, %v1163
  %v1171 = vld [vmem:[%s35] sm:$0x1]
  %v1173 = vlaneseq
  %v1174 = vshrl.u32 %v1173, 7
  %v1175 = vsub.s32 0, %v1174
  %v1176 = vrot.slane %v1171, %v1175
  %v1178 = vadd.f32 %v1165, %v1176
  %v1179 = vadd.f32 %v1166, %v1176
  %v1180 = vadd.f32 %v1167, %v1176
  %v1181 = vadd.f32 %v1168, %v1176
  %v1182 = vadd.f32 %v1169, %v1176
  %v1183 = vadd.f32 %v1170, %v1176
  %vm1184 = vcmask 130048
  %v1186 = vsel %vm1184, %v1120, 0
  %v1189 = vsel %vm1184, %v1121, 0
  %v1192 = vsel %vm1184, %v1122, 0
  %v1195 = vsel %vm1184, %v1123, 0
  %v1198 = vsel %vm1184, %v1124, 0
  %v1201 = vsel %vm1184, %v1125, 0
  %1203 = vmatprep.subr.mxu0 0.0
  %1204 = vmatpush1.msra.mxu0 %v1112
  %1205 = vmatprep.subr.mxu0 0.0
  %1206 = vmatpush1.msra.mxu0 %v1113
  %1207 = vmatprep.subr.mxu0 0.0
  %1208 = vmatpush1.msra.mxu0 0.0
  %1209 = vmatprep.subr.mxu0 0.0
  %1210 = vmatpush1.msra.mxu0 0.0
  %1211 = vmatprep.subr.mxu0 0.0
  %1212 = vmatpush1.msra.mxu0 0.0
  %1213 = vmatprep.subr.mxu0 0.0
  %1214 = vmatpush1.msra.mxu0 0.0
  %1215 = vmatprep.subr.mxu0 0.0
  %1216 = vmatpush1.msra.mxu0 0.0
  %1217 = vmatprep.subr.mxu0 0.0
  %1218 = vmatpush1.msra.mxu0 0.0
  %1219 = vmatprep.subr.mxu0 0.0
  %1220 = vmatpush1.msra.mxu0 0.0
  %1221 = vmatprep.subr.mxu0 0.0
  %1222 = vmatpush1.msra.mxu0 0.0
  %1223 = vmatprep.subr.mxu0 0.0
  %1224 = vmatpush1.msra.mxu0 0.0
  %1225 = vmatprep.subr.mxu0 0.0
  %1226 = vmatpush1.msra.mxu0 0.0
  %1227 = vmatprep.subr.mxu0 0.0
  %1228 = vmatpush1.msra.mxu0 0.0
  %1229 = vmatprep.subr.mxu0 0.0
  %1230 = vmatpush1.msra.mxu0 0.0
  %1231 = vmatprep.subr.mxu0 0.0
  %1232 = vmatpush1.msra.mxu0 0.0
  %1233 = vmatprep.subr.mxu0 0.0
  %1234 = vmatpush1.msra.mxu0 0.0
  %1235 = vmatprep.subr.mxu0 0.0
  %1236 = vmatpush1.msra.mxu0 0.0
  %1237 = vmatprep.subr.mxu0 0.0
  %1238 = vmatpush1.msra.mxu0 0.0
  %1239 = vmatprep.subr.mxu0 0.0
  %1240 = vmatpush1.msra.mxu0 0.0
  %1241 = vmatprep.subr.mxu0 0.0
  %1242 = vmatpush1.msra.mxu0 0.0
  %1243 = vmatprep.subr.mxu0 0.0
  %1244 = vmatpush1.msra.mxu0 0.0
  %1245 = vmatprep.subr.mxu0 0.0
  %1246 = vmatpush1.msra.mxu0 0.0
  %1247 = vmatprep.subr.mxu0 0.0
  %1248 = vmatpush1.msra.mxu0 0.0
  %1249 = vmatprep.subr.mxu0 0.0
  %1250 = vmatpush1.msra.mxu0 0.0
  %1251 = vmatprep.subr.mxu0 0.0
  %1252 = vmatpush1.msra.mxu0 0.0
  %1253 = vmatprep.subr.mxu0 0.0
  %1254 = vmatpush1.msra.mxu0 0.0
  %1255 = vmatprep.subr.mxu0 0.0
  %1256 = vmatpush1.msra.mxu0 0.0
  %1257 = vmatprep.subr.mxu0 0.0
  %1258 = vmatpush1.msra.mxu0 0.0
  %1259 = vmatprep.subr.mxu0 0.0
  %1260 = vmatpush1.msra.mxu0 0.0
  %1261 = vmatprep.subr.mxu0 0.0
  %1262 = vmatpush1.msra.mxu0 0.0
  %1263 = vmatprep.subr.mxu0 0.0
  %1264 = vmatpush1.msra.mxu0 0.0
  %1265 = vmatprep.subr.mxu0 0.0
  %1266 = vmatpush1.msra.mxu0 0.0
  %1267 = vmatprep.mubr.f32.mxu0 0.0
  %1268 = vmatmul.mubr.f32.gmra.mrb[0].mxu0 %v1186
  %v1269 = vpop.f32.mrb[0].mxu0
  %v1270 = vadd.f32 %v1178, %v1269
  %v1271 = vpop.f32.mrb[0].mxu0
  %1272 = vmatprep.mubr.f32.mxu0 0.0
  %1273 = vmatmul.mubr.f32.gmra.mrb[0].mxu0 %v1189
  %v1274 = vpop.f32.mrb[0].mxu0
  %v1275 = vadd.f32 %v1179, %v1274
  %v1276 = vpop.f32.mrb[0].mxu0
  %1277 = vmatprep.mubr.f32.mxu0 0.0
  %1278 = vmatmul.mubr.f32.gmra.mrb[0].mxu0 %v1192
  %v1279 = vpop.f32.mrb[0].mxu0
  %v1280 = vadd.f32 %v1180, %v1279
  %v1281 = vpop.f32.mrb[0].mxu0
  %1282 = vmatprep.mubr.f32.mxu0 0.0
  %1283 = vmatmul.mubr.f32.gmra.mrb[0].mxu0 %v1195
  %v1284 = vpop.f32.mrb[0].mxu0
  %v1285 = vadd.f32 %v1181, %v1284
  %v1286 = vpop.f32.mrb[0].mxu0
  %1287 = vmatprep.mubr.f32.mxu0 0.0
  %1288 = vmatmul.mubr.f32.gmra.mrb[0].mxu0 %v1198
  %v1289 = vpop.f32.mrb[0].mxu0
  %v1290 = vadd.f32 %v1182, %v1289
  %v1291 = vpop.f32.mrb[0].mxu0
  %1292 = vmatprep.mubr.f32.mxu0 0.0
  %1293 = vmatmul.mubr.f32.gmra.mrb[0].mxu0 %v1201
  %v1294 = vpop.f32.mrb[0].mxu0
  %v1295 = vadd.f32 %v1183, %v1294
  %v1296 = vpop.f32.mrb[0].mxu0
  %1297 = vdwg.mxu0
  %v1298 = vmax.f32 %v1270, 0.0
  %v1299 = vmax.f32 %v1275, 0.0
  %v1300 = vmax.f32 %v1280, 0.0
  %v1301 = vmax.f32 %v1285, 0.0
  %v1302 = vmax.f32 %v1290, 0.0
  %v1303 = vmax.f32 %v1295, 0.0
  %vm1304 = vcmask 392192
  %v1306 = vsel %vm1304, %v1126, 0
  %v1309 = vsel %vm1304, %v1127, 0
  %1311 = vmatprep.subr.mxu0 0.0
  %1312 = vmatpush1.msra.mxu0 %v1298
  %1313 = vmatprep.subr.mxu0 0.0
  %1314 = vmatpush1.msra.mxu0 %v1299
  %1315 = vmatprep.subr.mxu0 0.0
  %1316 = vmatpush1.msra.mxu0 %v1300
  %1317 = vmatprep.subr.mxu0 0.0
  %1318 = vmatpush1.msra.mxu0 %v1301
  %1319 = vmatprep.subr.mxu0 0.0
  %1320 = vmatpush1.msra.mxu0 %v1302
  %1321 = vmatprep.subr.mxu0 0.0
  %1322 = vmatpush1.msra.mxu0 %v1303
  %1323 = vmatprep.subr.mxu0 0.0
  %1324 = vmatpush1.msra.mxu0 0.0
  %1325 = vmatprep.subr.mxu0 0.0
  %1326 = vmatpush1.msra.mxu0 0.0
  %1327 = vmatprep.subr.mxu0 0.0
  %1328 = vmatpush1.msra.mxu0 0.0
  %1329 = vmatprep.subr.mxu0 0.0
  %1330 = vmatpush1.msra.mxu0 0.0
  %1331 = vmatprep.subr.mxu0 0.0
  %1332 = vmatpush1.msra.mxu0 0.0
  %1333 = vmatprep.subr.mxu0 0.0
  %1334 = vmatpush1.msra.mxu0 0.0
  %1335 = vmatprep.subr.mxu0 0.0
  %1336 = vmatpush1.msra.mxu0 0.0
  %1337 = vmatprep.subr.mxu0 0.0
  %1338 = vmatpush1.msra.mxu0 0.0
  %1339 = vmatprep.subr.mxu0 0.0
  %1340 = vmatpush1.msra.mxu0 0.0
  %1341 = vmatprep.subr.mxu0 0.0
  %1342 = vmatpush1.msra.mxu0 0.0
  %1343 = vmatprep.subr.mxu0 0.0
  %1344 = vmatpush1.msra.mxu0 0.0
  %1345 = vmatprep.subr.mxu0 0.0
  %1346 = vmatpush1.msra.mxu0 0.0
  %1347 = vmatprep.subr.mxu0 0.0
  %1348 = vmatpush1.msra.mxu0 0.0
  %1349 = vmatprep.subr.mxu0 0.0
  %1350 = vmatpush1.msra.mxu0 0.0
  %1351 = vmatprep.subr.mxu0 0.0
  %1352 = vmatpush1.msra.mxu0 0.0
  %1353 = vmatprep.subr.mxu0 0.0
  %1354 = vmatpush1.msra.mxu0 0.0
  %1355 = vmatprep.subr.mxu0 0.0
  %1356 = vmatpush1.msra.mxu0 0.0
  %1357 = vmatprep.subr.mxu0 0.0
  %1358 = vmatpush1.msra.mxu0 0.0
  %1359 = vmatprep.subr.mxu0 0.0
  %1360 = vmatpush1.msra.mxu0 0.0
  %1361 = vmatprep.subr.mxu0 0.0
  %1362 = vmatpush1.msra.mxu0 0.0
  %1363 = vmatprep.subr.mxu0 0.0
  %1364 = vmatpush1.msra.mxu0 0.0
  %1365 = vmatprep.subr.mxu0 0.0
  %1366 = vmatpush1.msra.mxu0 0.0
  %1367 = vmatprep.subr.mxu0 0.0
  %1368 = vmatpush1.msra.mxu0 0.0
  %1369 = vmatprep.subr.mxu0 0.0
  %1370 = vmatpush1.msra.mxu0 0.0
  %1371 = vmatprep.subr.mxu0 0.0
  %1372 = vmatpush1.msra.mxu0 0.0
  %1373 = vmatprep.subr.mxu0 0.0
  %1374 = vmatpush1.msra.mxu0 0.0
  %1375 = vmatprep.mubr.f32.mxu0 0.0
  %1376 = vmatmul.mubr.f32.gmra.mrb[0].mxu0 %v1306
  %v1377 = vpop.f32.mrb[0].mxu0
  %v1378 = vadd.f32 0.0, %v1377
  %v1379 = vpop.f32.mrb[0].mxu0
  %1380 = vmatprep.mubr.f32.mxu0 0.0
  %1381 = vmatmul.mubr.f32.gmra.mrb[0].mxu0 %v1309
  %v1382 = vpop.f32.mrb[0].mxu0
  %v1383 = vadd.f32 0.0, %v1382
  %v1384 = vpop.f32.mrb[0].mxu0
  %1385 = vdwg.mxu0
  %v1386 = vadd.f32 %v1112, %v1378
  %v1387 = vadd.f32 %v1113, %v1383
  %v1388 = vld [vmem:[%s37] sm:$0xff]
  %v1389 = vld [vmem:[%s37 + $0x8] sm:$0xff]
  %v1390 = vld [vmem:[%s37 + $0x10] sm:$0xff]
  %v1391 = vld [vmem:[%s37 + $0x18] sm:$0xff]
  %v1392 = vld [vmem:[%s39] sm:$0x1]
  %v1394 = vlaneseq
  %v1395 = vshrl.u32 %v1394, 7
  %v1396 = vsub.s32 0, %v1395
  %v1397 = vrot.slane %v1392, %v1396
  %v1400 = vsel %vm368, %v1386, 0
  %v1403 = vsel %vm368, %v1387, 0
  %1405 = vmatprep.subr.mxu0 0.0
  %1406 = vmatpush1.msra.mxu0 %v1388
  %1407 = vmatprep.subr.mxu0 0.0
  %1408 = vmatpush1.msra.mxu0 %v1389
  %1409 = vmatprep.subr.mxu0 0.0
  %1410 = vmatpush1.msra.mxu0 %v1390
  %1411 = vmatprep.subr.mxu0 0.0
  %1412 = vmatpush1.msra.mxu0 %v1391
  %1413 = vmatprep.subr.mxu0 0.0
  %1414 = vmatpush1.msra.mxu0 0.0
  %1415 = vmatprep.subr.mxu0 0.0
  %1416 = vmatpush1.msra.mxu0 0.0
  %1417 = vmatprep.subr.mxu0 0.0
  %1418 = vmatpush1.msra.mxu0 0.0
  %1419 = vmatprep.subr.mxu0 0.0
  %1420 = vmatpush1.msra.mxu0 0.0
  %1421 = vmatprep.subr.mxu0 0.0
  %1422 = vmatpush1.msra.mxu0 0.0
  %1423 = vmatprep.subr.mxu0 0.0
  %1424 = vmatpush1.msra.mxu0 0.0
  %1425 = vmatprep.subr.mxu0 0.0
  %1426 = vmatpush1.msra.mxu0 0.0
  %1427 = vmatprep.subr.mxu0 0.0
  %1428 = vmatpush1.msra.mxu0 0.0
  %1429 = vmatprep.subr.mxu0 0.0
  %1430 = vmatpush1.msra.mxu0 0.0
  %1431 = vmatprep.subr.mxu0 0.0
  %1432 = vmatpush1.msra.mxu0 0.0
  %1433 = vmatprep.subr.mxu0 0.0
  %1434 = vmatpush1.msra.mxu0 0.0
  %1435 = vmatprep.subr.mxu0 0.0
  %1436 = vmatpush1.msra.mxu0 0.0
  %1437 = vmatprep.subr.mxu0 0.0
  %1438 = vmatpush1.msra.mxu0 0.0
  %1439 = vmatprep.subr.mxu0 0.0
  %1440 = vmatpush1.msra.mxu0 0.0
  %1441 = vmatprep.subr.mxu0 0.0
  %1442 = vmatpush1.msra.mxu0 0.0
  %1443 = vmatprep.subr.mxu0 0.0
  %1444 = vmatpush1.msra.mxu0 0.0
  %1445 = vmatprep.subr.mxu0 0.0
  %1446 = vmatpush1.msra.mxu0 0.0
  %1447 = vmatprep.subr.mxu0 0.0
  %1448 = vmatpush1.msra.mxu0 0.0
  %1449 = vmatprep.subr.mxu0 0.0
  %1450 = vmatpush1.msra.mxu0 0.0
  %1451 = vmatprep.subr.mxu0 0.0
  %1452 = vmatpush1.msra.mxu0 0.0
  %1453 = vmatprep.subr.mxu0 0.0
  %1454 = vmatpush1.msra.mxu0 0.0
  %1455 = vmatprep.subr.mxu0 0.0
  %1456 = vmatpush1.msra.mxu0 0.0
  %1457 = vmatprep.subr.mxu0 0.0
  %1458 = vmatpush1.msra.mxu0 0.0
  %1459 = vmatprep.subr.mxu0 0.0
  %1460 = vmatpush1.msra.mxu0 0.0
  %1461 = vmatprep.subr.mxu0 0.0
  %1462 = vmatpush1.msra.mxu0 0.0
  %1463 = vmatprep.subr.mxu0 0.0
  %1464 = vmatpush1.msra.mxu0 0.0
  %1465 = vmatprep.subr.mxu0 0.0
  %1466 = vmatpush1.msra.mxu0 0.0
  %1467 = vmatprep.subr.mxu0 0.0
  %1468 = vmatpush1.msra.mxu0 0.0
  %1469 = vmatprep.mubr.f32.mxu0 0.0
  %1470 = vmatmul.mubr.f32.gmra.mrb[0].mxu0 %v1400
  %v1471 = vpop.f32.mrb[0].mxu0
  %v1472 = vadd.f32 %v1397, %v1471
  %v1473 = vpop.f32.mrb[0].mxu0
  %1474 = vmatprep.mubr.f32.mxu0 0.0
  %1475 = vmatmul.mubr.f32.gmra.mrb[0].mxu0 %v1403
  %v1476 = vpop.f32.mrb[0].mxu0
  %v1477 = vadd.f32 %v1397, %v1476
  %v1478 = vpop.f32.mrb[0].mxu0
  %1479 = vdwg.mxu0
  %v1480 = vmax.f32 %v1472, 0.0
  %v1481 = vmax.f32 %v1477, 0.0
  %v1482 = vld [vmem:[%s41] sm:$0xff]
  %v1483 = vld [vmem:[%s41 + $0x8] sm:$0xff]
  %v1484 = vld [vmem:[%s41 + $0x10] sm:$0xff]
  %v1485 = vld [vmem:[%s41 + $0x18] sm:$0xff]
  %v1486 = vld [vmem:[%s43] sm:$0x1]
  %v1488 = vlaneseq
  %v1489 = vshrl.u32 %v1488, 7
  %v1490 = vsub.s32 0, %v1489
  %v1491 = vrot.slane %v1486, %v1490
  %v1494 = vsel %vm368, %v1480, 0
  %v1497 = vsel %vm368, %v1481, 0
  %1499 = vmatprep.subr.mxu0 0.0
  %1500 = vmatpush1.msra.mxu0 %v1482
  %1501 = vmatprep.subr.mxu0 0.0
  %1502 = vmatpush1.msra.mxu0 %v1483
  %1503 = vmatprep.subr.mxu0 0.0
  %1504 = vmatpush1.msra.mxu0 %v1484
  %1505 = vmatprep.subr.mxu0 0.0
  %1506 = vmatpush1.msra.mxu0 %v1485
  %1507 = vmatprep.subr.mxu0 0.0
  %1508 = vmatpush1.msra.mxu0 0.0
  %1509 = vmatprep.subr.mxu0 0.0
  %1510 = vmatpush1.msra.mxu0 0.0
  %1511 = vmatprep.subr.mxu0 0.0
  %1512 = vmatpush1.msra.mxu0 0.0
  %1513 = vmatprep.subr.mxu0 0.0
  %1514 = vmatpush1.msra.mxu0 0.0
  %1515 = vmatprep.subr.mxu0 0.0
  %1516 = vmatpush1.msra.mxu0 0.0
  %1517 = vmatprep.subr.mxu0 0.0
  %1518 = vmatpush1.msra.mxu0 0.0
  %1519 = vmatprep.subr.mxu0 0.0
  %1520 = vmatpush1.msra.mxu0 0.0
  %1521 = vmatprep.subr.mxu0 0.0
  %1522 = vmatpush1.msra.mxu0 0.0
  %1523 = vmatprep.subr.mxu0 0.0
  %1524 = vmatpush1.msra.mxu0 0.0
  %1525 = vmatprep.subr.mxu0 0.0
  %1526 = vmatpush1.msra.mxu0 0.0
  %1527 = vmatprep.subr.mxu0 0.0
  %1528 = vmatpush1.msra.mxu0 0.0
  %1529 = vmatprep.subr.mxu0 0.0
  %1530 = vmatpush1.msra.mxu0 0.0
  %1531 = vmatprep.subr.mxu0 0.0
  %1532 = vmatpush1.msra.mxu0 0.0
  %1533 = vmatprep.subr.mxu0 0.0
  %1534 = vmatpush1.msra.mxu0 0.0
  %1535 = vmatprep.subr.mxu0 0.0
  %1536 = vmatpush1.msra.mxu0 0.0
  %1537 = vmatprep.subr.mxu0 0.0
  %1538 = vmatpush1.msra.mxu0 0.0
  %1539 = vmatprep.subr.mxu0 0.0
  %1540 = vmatpush1.msra.mxu0 0.0
  %1541 = vmatprep.subr.mxu0 0.0
  %1542 = vmatpush1.msra.mxu0 0.0
  %1543 = vmatprep.subr.mxu0 0.0
  %1544 = vmatpush1.msra.mxu0 0.0
  %1545 = vmatprep.subr.mxu0 0.0
  %1546 = vmatpush1.msra.mxu0 0.0
  %1547 = vmatprep.subr.mxu0 0.0
  %1548 = vmatpush1.msra.mxu0 0.0
  %1549 = vmatprep.subr.mxu0 0.0
  %1550 = vmatpush1.msra.mxu0 0.0
  %1551 = vmatprep.subr.mxu0 0.0
  %1552 = vmatpush1.msra.mxu0 0.0
  %1553 = vmatprep.subr.mxu0 0.0
  %1554 = vmatpush1.msra.mxu0 0.0
  %1555 = vmatprep.subr.mxu0 0.0
  %1556 = vmatpush1.msra.mxu0 0.0
  %1557 = vmatprep.subr.mxu0 0.0
  %1558 = vmatpush1.msra.mxu0 0.0
  %1559 = vmatprep.subr.mxu0 0.0
  %1560 = vmatpush1.msra.mxu0 0.0
  %1561 = vmatprep.subr.mxu0 0.0
  %1562 = vmatpush1.msra.mxu0 0.0
  %1563 = vmatprep.mubr.f32.mxu0 0.0
  %1564 = vmatmul.mubr.f32.gmra.mrb[0].mxu0 %v1494
  %v1565 = vpop.f32.mrb[0].mxu0
  %v1566 = vadd.f32 %v1491, %v1565
  %v1567 = vpop.f32.mrb[0].mxu0
  %1568 = vmatprep.mubr.f32.mxu0 0.0
  %1569 = vmatmul.mubr.f32.gmra.mrb[0].mxu0 %v1497
  %v1570 = vpop.f32.mrb[0].mxu0
  %v1571 = vadd.f32 %v1491, %v1570
  %v1572 = vpop.f32.mrb[0].mxu0
  %1573 = vdwg.mxu0
  %v1574 = vmax.f32 %v1566, 0.0
  %v1575 = vmax.f32 %v1571, 0.0
  %v1576 = vld [vmem:[%s45] sm:$0x1]
  %v1578 = vlaneseq
  %v1579 = vshrl.u32 %v1578, 7
  %v1580 = vsub.s32 0, %v1579
  %v1581 = vrot.slane %v1576, %v1580
  %v1583 = vmul.f32 %v1132, %v1581
  %v1584 = vmul.f32 %v1137, %v1581
  %v1585 = vmul.f32 %v1142, %v1581
  %v1586 = vmul.f32 %v1147, %v1581
  %v1587 = vmul.f32 %v1152, %v1581
  %v1588 = vmul.f32 %v1157, %v1581
  %v1589 = vld [vmem:[%s47] sm:$0x1]
  %v1591 = vlaneseq
  %v1592 = vshrl.u32 %v1591, 7
  %v1593 = vsub.s32 0, %v1592
  %v1594 = vrot.slane %v1589, %v1593
  %v1596 = vadd.f32 %v1583, %v1594
  %v1597 = vadd.f32 %v1584, %v1594
  %v1598 = vadd.f32 %v1585, %v1594
  %v1599 = vadd.f32 %v1586, %v1594
  %v1600 = vadd.f32 %v1587, %v1594
  %v1601 = vadd.f32 %v1588, %v1594
  %1602 = vmatprep.subr.mxu0 0.0
  %1603 = vmatpush1.msra.mxu0 %v1574
  %1604 = vmatprep.subr.mxu0 0.0
  %1605 = vmatpush1.msra.mxu0 %v1575
  %1606 = vmatprep.subr.mxu0 0.0
  %1607 = vmatpush1.msra.mxu0 0.0
  %1608 = vmatprep.subr.mxu0 0.0
  %1609 = vmatpush1.msra.mxu0 0.0
  %1610 = vmatprep.subr.mxu0 0.0
  %1611 = vmatpush1.msra.mxu0 0.0
  %1612 = vmatprep.subr.mxu0 0.0
  %1613 = vmatpush1.msra.mxu0 0.0
  %1614 = vmatprep.subr.mxu0 0.0
  %1615 = vmatpush1.msra.mxu0 0.0
  %1616 = vmatprep.subr.mxu0 0.0
  %1617 = vmatpush1.msra.mxu0 0.0
  %1618 = vmatprep.subr.mxu0 0.0
  %1619 = vmatpush1.msra.mxu0 0.0
  %1620 = vmatprep.subr.mxu0 0.0
  %1621 = vmatpush1.msra.mxu0 0.0
  %1622 = vmatprep.subr.mxu0 0.0
  %1623 = vmatpush1.msra.mxu0 0.0
  %1624 = vmatprep.subr.mxu0 0.0
  %1625 = vmatpush1.msra.mxu0 0.0
  %1626 = vmatprep.subr.mxu0 0.0
  %1627 = vmatpush1.msra.mxu0 0.0
  %1628 = vmatprep.subr.mxu0 0.0
  %1629 = vmatpush1.msra.mxu0 0.0
  %1630 = vmatprep.subr.mxu0 0.0
  %1631 = vmatpush1.msra.mxu0 0.0
  %1632 = vmatprep.subr.mxu0 0.0
  %1633 = vmatpush1.msra.mxu0 0.0
  %1634 = vmatprep.subr.mxu0 0.0
  %1635 = vmatpush1.msra.mxu0 0.0
  %1636 = vmatprep.subr.mxu0 0.0
  %1637 = vmatpush1.msra.mxu0 0.0
  %1638 = vmatprep.subr.mxu0 0.0
  %1639 = vmatpush1.msra.mxu0 0.0
  %1640 = vmatprep.subr.mxu0 0.0
  %1641 = vmatpush1.msra.mxu0 0.0
  %1642 = vmatprep.subr.mxu0 0.0
  %1643 = vmatpush1.msra.mxu0 0.0
  %1644 = vmatprep.subr.mxu0 0.0
  %1645 = vmatpush1.msra.mxu0 0.0
  %1646 = vmatprep.subr.mxu0 0.0
  %1647 = vmatpush1.msra.mxu0 0.0
  %1648 = vmatprep.subr.mxu0 0.0
  %1649 = vmatpush1.msra.mxu0 0.0
  %1650 = vmatprep.subr.mxu0 0.0
  %1651 = vmatpush1.msra.mxu0 0.0
  %1652 = vmatprep.subr.mxu0 0.0
  %1653 = vmatpush1.msra.mxu0 0.0
  %1654 = vmatprep.subr.mxu0 0.0
  %1655 = vmatpush1.msra.mxu0 0.0
  %1656 = vmatprep.subr.mxu0 0.0
  %1657 = vmatpush1.msra.mxu0 0.0
  %1658 = vmatprep.subr.mxu0 0.0
  %1659 = vmatpush1.msra.mxu0 0.0
  %1660 = vmatprep.subr.mxu0 0.0
  %1661 = vmatpush1.msra.mxu0 0.0
  %1662 = vmatprep.subr.mxu0 0.0
  %1663 = vmatpush1.msra.mxu0 0.0
  %1664 = vmatprep.subr.mxu0 0.0
  %1665 = vmatpush1.msra.mxu0 0.0
  %1666 = vmatprep.mubr.f32.mxu0 0.0
  %1667 = vmatmul.mubr.f32.gmra.mrb[0].mxu0 %v1186
  %v1668 = vpop.f32.mrb[0].mxu0
  %v1669 = vadd.f32 %v1596, %v1668
  %v1670 = vpop.f32.mrb[0].mxu0
  %1671 = vmatprep.mubr.f32.mxu0 0.0
  %1672 = vmatmul.mubr.f32.gmra.mrb[0].mxu0 %v1189
  %v1673 = vpop.f32.mrb[0].mxu0
  %v1674 = vadd.f32 %v1597, %v1673
  %v1675 = vpop.f32.mrb[0].mxu0
  %1676 = vmatprep.mubr.f32.mxu0 0.0
  %1677 = vmatmul.mubr.f32.gmra.mrb[0].mxu0 %v1192
  %v1678 = vpop.f32.mrb[0].mxu0
  %v1679 = vadd.f32 %v1598, %v1678
  %v1680 = vpop.f32.mrb[0].mxu0
  %1681 = vmatprep.mubr.f32.mxu0 0.0
  %1682 = vmatmul.mubr.f32.gmra.mrb[0].mxu0 %v1195
  %v1683 = vpop.f32.mrb[0].mxu0
  %v1684 = vadd.f32 %v1599, %v1683
  %v1685 = vpop.f32.mrb[0].mxu0
  %1686 = vmatprep.mubr.f32.mxu0 0.0
  %1687 = vmatmul.mubr.f32.gmra.mrb[0].mxu0 %v1198
  %v1688 = vpop.f32.mrb[0].mxu0
  %v1689 = vadd.f32 %v1600, %v1688
  %v1690 = vpop.f32.mrb[0].mxu0
  %1691 = vmatprep.mubr.f32.mxu0 0.0
  %1692 = vmatmul.mubr.f32.gmra.mrb[0].mxu0 %v1201
  %v1693 = vpop.f32.mrb[0].mxu0
  %v1694 = vadd.f32 %v1601, %v1693
  %v1695 = vpop.f32.mrb[0].mxu0
  %1696 = vdwg.mxu0
  %v1697 = vmax.f32 %v1669, 0.0
  %v1698 = vmax.f32 %v1674, 0.0
  %v1699 = vmax.f32 %v1679, 0.0
  %v1700 = vmax.f32 %v1684, 0.0
  %v1701 = vmax.f32 %v1689, 0.0
  %v1702 = vmax.f32 %v1694, 0.0
  %1703 = vmatprep.subr.mxu0 0.0
  %1704 = vmatpush1.msra.mxu0 %v1697
  %1705 = vmatprep.subr.mxu0 0.0
  %1706 = vmatpush1.msra.mxu0 %v1698
  %1707 = vmatprep.subr.mxu0 0.0
  %1708 = vmatpush1.msra.mxu0 %v1699
  %1709 = vmatprep.subr.mxu0 0.0
  %1710 = vmatpush1.msra.mxu0 %v1700
  %1711 = vmatprep.subr.mxu0 0.0
  %1712 = vmatpush1.msra.mxu0 %v1701
  %1713 = vmatprep.subr.mxu0 0.0
  %1714 = vmatpush1.msra.mxu0 %v1702
  %1715 = vmatprep.subr.mxu0 0.0
  %1716 = vmatpush1.msra.mxu0 0.0
  %1717 = vmatprep.subr.mxu0 0.0
  %1718 = vmatpush1.msra.mxu0 0.0
  %1719 = vmatprep.subr.mxu0 0.0
  %1720 = vmatpush1.msra.mxu0 0.0
  %1721 = vmatprep.subr.mxu0 0.0
  %1722 = vmatpush1.msra.mxu0 0.0
  %1723 = vmatprep.subr.mxu0 0.0
  %1724 = vmatpush1.msra.mxu0 0.0
  %1725 = vmatprep.subr.mxu0 0.0
  %1726 = vmatpush1.msra.mxu0 0.0
  %1727 = vmatprep.subr.mxu0 0.0
  %1728 = vmatpush1.msra.mxu0 0.0
  %1729 = vmatprep.subr.mxu0 0.0
  %1730 = vmatpush1.msra.mxu0 0.0
  %1731 = vmatprep.subr.mxu0 0.0
  %1732 = vmatpush1.msra.mxu0 0.0
  %1733 = vmatprep.subr.mxu0 0.0
  %1734 = vmatpush1.msra.mxu0 0.0
  %1735 = vmatprep.subr.mxu0 0.0
  %1736 = vmatpush1.msra.mxu0 0.0
  %1737 = vmatprep.subr.mxu0 0.0
  %1738 = vmatpush1.msra.mxu0 0.0
  %1739 = vmatprep.subr.mxu0 0.0
  %1740 = vmatpush1.msra.mxu0 0.0
  %1741 = vmatprep.subr.mxu0 0.0
  %1742 = vmatpush1.msra.mxu0 0.0
  %1743 = vmatprep.subr.mxu0 0.0
  %1744 = vmatpush1.msra.mxu0 0.0
  %1745 = vmatprep.subr.mxu0 0.0
  %1746 = vmatpush1.msra.mxu0 0.0
  %1747 = vmatprep.subr.mxu0 0.0
  %1748 = vmatpush1.msra.mxu0 0.0
  %1749 = vmatprep.subr.mxu0 0.0
  %1750 = vmatpush1.msra.mxu0 0.0
  %1751 = vmatprep.subr.mxu0 0.0
  %1752 = vmatpush1.msra.mxu0 0.0
  %1753 = vmatprep.subr.mxu0 0.0
  %1754 = vmatpush1.msra.mxu0 0.0
  %1755 = vmatprep.subr.mxu0 0.0
  %1756 = vmatpush1.msra.mxu0 0.0
  %1757 = vmatprep.subr.mxu0 0.0
  %1758 = vmatpush1.msra.mxu0 0.0
  %1759 = vmatprep.subr.mxu0 0.0
  %1760 = vmatpush1.msra.mxu0 0.0
  %1761 = vmatprep.subr.mxu0 0.0
  %1762 = vmatpush1.msra.mxu0 0.0
  %1763 = vmatprep.subr.mxu0 0.0
  %1764 = vmatpush1.msra.mxu0 0.0
  %1765 = vmatprep.subr.mxu0 0.0
  %1766 = vmatpush1.msra.mxu0 0.0
  %1767 = vmatprep.mubr.f32.mxu0 0.0
  %1768 = vmatmul.mubr.f32.gmra.mrb[0].mxu0 %v1306
  %v1769 = vpop.f32.mrb[0].mxu0
  %v1770 = vadd.f32 0.0, %v1769
  %v1771 = vpop.f32.mrb[0].mxu0
  %1772 = vmatprep.mubr.f32.mxu0 0.0
  %1773 = vmatmul.mubr.f32.gmra.mrb[0].mxu0 %v1309
  %v1774 = vpop.f32.mrb[0].mxu0
  %v1775 = vadd.f32 0.0, %v1774
  %v1776 = vpop.f32.mrb[0].mxu0
  %1777 = vdwg.mxu0
  %v1778 = vadd.f32 %v1574, %v1770
  %v1779 = vadd.f32 %v1575, %v1775
  %v1780 = vld [vmem:[%s49] sm:$0xff]
  %v1781 = vld [vmem:[%s49 + $0x8] sm:$0xff]
  %v1782 = vld [vmem:[%s49 + $0x10] sm:$0xff]
  %v1783 = vld [vmem:[%s49 + $0x18] sm:$0xff]
  %v1784 = vld [vmem:[%s51] sm:$0x1]
  %v1786 = vlaneseq
  %v1787 = vshrl.u32 %v1786, 7
  %v1788 = vsub.s32 0, %v1787
  %v1789 = vrot.slane %v1784, %v1788
  %v1792 = vsel %vm368, %v1778, 0
  %v1795 = vsel %vm368, %v1779, 0
  %1797 = vmatprep.subr.mxu0 0.0
  %1798 = vmatpush1.msra.mxu0 %v1780
  %1799 = vmatprep.subr.mxu0 0.0
  %1800 = vmatpush1.msra.mxu0 %v1781
  %1801 = vmatprep.subr.mxu0 0.0
  %1802 = vmatpush1.msra.mxu0 %v1782
  %1803 = vmatprep.subr.mxu0 0.0
  %1804 = vmatpush1.msra.mxu0 %v1783
  %1805 = vmatprep.subr.mxu0 0.0
  %1806 = vmatpush1.msra.mxu0 0.0
  %1807 = vmatprep.subr.mxu0 0.0
  %1808 = vmatpush1.msra.mxu0 0.0
  %1809 = vmatprep.subr.mxu0 0.0
  %1810 = vmatpush1.msra.mxu0 0.0
  %1811 = vmatprep.subr.mxu0 0.0
  %1812 = vmatpush1.msra.mxu0 0.0
  %1813 = vmatprep.subr.mxu0 0.0
  %1814 = vmatpush1.msra.mxu0 0.0
  %1815 = vmatprep.subr.mxu0 0.0
  %1816 = vmatpush1.msra.mxu0 0.0
  %1817 = vmatprep.subr.mxu0 0.0
  %1818 = vmatpush1.msra.mxu0 0.0
  %1819 = vmatprep.subr.mxu0 0.0
  %1820 = vmatpush1.msra.mxu0 0.0
  %1821 = vmatprep.subr.mxu0 0.0
  %1822 = vmatpush1.msra.mxu0 0.0
  %1823 = vmatprep.subr.mxu0 0.0
  %1824 = vmatpush1.msra.mxu0 0.0
  %1825 = vmatprep.subr.mxu0 0.0
  %1826 = vmatpush1.msra.mxu0 0.0
  %1827 = vmatprep.subr.mxu0 0.0
  %1828 = vmatpush1.msra.mxu0 0.0
  %1829 = vmatprep.subr.mxu0 0.0
  %1830 = vmatpush1.msra.mxu0 0.0
  %1831 = vmatprep.subr.mxu0 0.0
  %1832 = vmatpush1.msra.mxu0 0.0
  %1833 = vmatprep.subr.mxu0 0.0
  %1834 = vmatpush1.msra.mxu0 0.0
  %1835 = vmatprep.subr.mxu0 0.0
  %1836 = vmatpush1.msra.mxu0 0.0
  %1837 = vmatprep.subr.mxu0 0.0
  %1838 = vmatpush1.msra.mxu0 0.0
  %1839 = vmatprep.subr.mxu0 0.0
  %1840 = vmatpush1.msra.mxu0 0.0
  %1841 = vmatprep.subr.mxu0 0.0
  %1842 = vmatpush1.msra.mxu0 0.0
  %1843 = vmatprep.subr.mxu0 0.0
  %1844 = vmatpush1.msra.mxu0 0.0
  %1845 = vmatprep.subr.mxu0 0.0
  %1846 = vmatpush1.msra.mxu0 0.0
  %1847 = vmatprep.subr.mxu0 0.0
  %1848 = vmatpush1.msra.mxu0 0.0
  %1849 = vmatprep.subr.mxu0 0.0
  %1850 = vmatpush1.msra.mxu0 0.0
  %1851 = vmatprep.subr.mxu0 0.0
  %1852 = vmatpush1.msra.mxu0 0.0
  %1853 = vmatprep.subr.mxu0 0.0
  %1854 = vmatpush1.msra.mxu0 0.0
  %1855 = vmatprep.subr.mxu0 0.0
  %1856 = vmatpush1.msra.mxu0 0.0
  %1857 = vmatprep.subr.mxu0 0.0
  %1858 = vmatpush1.msra.mxu0 0.0
  %1859 = vmatprep.subr.mxu0 0.0
  %1860 = vmatpush1.msra.mxu0 0.0
  %1861 = vmatprep.mubr.f32.mxu0 0.0
  %1862 = vmatmul.mubr.f32.gmra.mrb[0].mxu0 %v1792
  %v1863 = vpop.f32.mrb[0].mxu0
  %v1864 = vadd.f32 %v1789, %v1863
  %v1865 = vpop.f32.mrb[0].mxu0
  %1866 = vmatprep.mubr.f32.mxu0 0.0
  %1867 = vmatmul.mubr.f32.gmra.mrb[0].mxu0 %v1795
  %v1868 = vpop.f32.mrb[0].mxu0
  %v1869 = vadd.f32 %v1789, %v1868
  %v1870 = vpop.f32.mrb[0].mxu0
  %1871 = vdwg.mxu0
  %v1872 = vmax.f32 %v1864, 0.0
  %v1873 = vmax.f32 %v1869, 0.0
  %v1874 = vld [vmem:[%s53] sm:$0xff]
  %v1875 = vld [vmem:[%s53 + $0x8] sm:$0xff]
  %v1876 = vld [vmem:[%s53 + $0x10] sm:$0xff]
  %v1877 = vld [vmem:[%s53 + $0x18] sm:$0xff]
  %v1878 = vld [vmem:[%s55] sm:$0x1]
  %v1880 = vlaneseq
  %v1881 = vshrl.u32 %v1880, 7
  %v1882 = vsub.s32 0, %v1881
  %v1883 = vrot.slane %v1878, %v1882
  %v1886 = vsel %vm368, %v1872, 0
  %v1889 = vsel %vm368, %v1873, 0
  %1891 = vmatprep.subr.mxu0 0.0
  %1892 = vmatpush1.msra.mxu0 %v1874
  %1893 = vmatprep.subr.mxu0 0.0
  %1894 = vmatpush1.msra.mxu0 %v1875
  %1895 = vmatprep.subr.mxu0 0.0
  %1896 = vmatpush1.msra.mxu0 %v1876
  %1897 = vmatprep.subr.mxu0 0.0
  %1898 = vmatpush1.msra.mxu0 %v1877
  %1899 = vmatprep.subr.mxu0 0.0
  %1900 = vmatpush1.msra.mxu0 0.0
  %1901 = vmatprep.subr.mxu0 0.0
  %1902 = vmatpush1.msra.mxu0 0.0
  %1903 = vmatprep.subr.mxu0 0.0
  %1904 = vmatpush1.msra.mxu0 0.0
  %1905 = vmatprep.subr.mxu0 0.0
  %1906 = vmatpush1.msra.mxu0 0.0
  %1907 = vmatprep.subr.mxu0 0.0
  %1908 = vmatpush1.msra.mxu0 0.0
  %1909 = vmatprep.subr.mxu0 0.0
  %1910 = vmatpush1.msra.mxu0 0.0
  %1911 = vmatprep.subr.mxu0 0.0
  %1912 = vmatpush1.msra.mxu0 0.0
  %1913 = vmatprep.subr.mxu0 0.0
  %1914 = vmatpush1.msra.mxu0 0.0
  %1915 = vmatprep.subr.mxu0 0.0
  %1916 = vmatpush1.msra.mxu0 0.0
  %1917 = vmatprep.subr.mxu0 0.0
  %1918 = vmatpush1.msra.mxu0 0.0
  %1919 = vmatprep.subr.mxu0 0.0
  %1920 = vmatpush1.msra.mxu0 0.0
  %1921 = vmatprep.subr.mxu0 0.0
  %1922 = vmatpush1.msra.mxu0 0.0
  %1923 = vmatprep.subr.mxu0 0.0
  %1924 = vmatpush1.msra.mxu0 0.0
  %1925 = vmatprep.subr.mxu0 0.0
  %1926 = vmatpush1.msra.mxu0 0.0
  %1927 = vmatprep.subr.mxu0 0.0
  %1928 = vmatpush1.msra.mxu0 0.0
  %1929 = vmatprep.subr.mxu0 0.0
  %1930 = vmatpush1.msra.mxu0 0.0
  %1931 = vmatprep.subr.mxu0 0.0
  %1932 = vmatpush1.msra.mxu0 0.0
  %1933 = vmatprep.subr.mxu0 0.0
  %1934 = vmatpush1.msra.mxu0 0.0
  %1935 = vmatprep.subr.mxu0 0.0
  %1936 = vmatpush1.msra.mxu0 0.0
  %1937 = vmatprep.subr.mxu0 0.0
  %1938 = vmatpush1.msra.mxu0 0.0
  %1939 = vmatprep.subr.mxu0 0.0
  %1940 = vmatpush1.msra.mxu0 0.0
  %1941 = vmatprep.subr.mxu0 0.0
  %1942 = vmatpush1.msra.mxu0 0.0
  %1943 = vmatprep.subr.mxu0 0.0
  %1944 = vmatpush1.msra.mxu0 0.0
  %1945 = vmatprep.subr.mxu0 0.0
  %1946 = vmatpush1.msra.mxu0 0.0
  %1947 = vmatprep.subr.mxu0 0.0
  %1948 = vmatpush1.msra.mxu0 0.0
  %1949 = vmatprep.subr.mxu0 0.0
  %1950 = vmatpush1.msra.mxu0 0.0
  %1951 = vmatprep.subr.mxu0 0.0
  %1952 = vmatpush1.msra.mxu0 0.0
  %1953 = vmatprep.subr.mxu0 0.0
  %1954 = vmatpush1.msra.mxu0 0.0
  %1955 = vmatprep.mubr.f32.mxu0 0.0
  %1956 = vmatmul.mubr.f32.gmra.mrb[0].mxu0 %v1886
  %v1957 = vpop.f32.mrb[0].mxu0
  %v1958 = vadd.f32 %v1883, %v1957
  %v1959 = vpop.f32.mrb[0].mxu0
  %1960 = vmatprep.mubr.f32.mxu0 0.0
  %1961 = vmatmul.mubr.f32.gmra.mrb[0].mxu0 %v1889
  %v1962 = vpop.f32.mrb[0].mxu0
  %v1963 = vadd.f32 %v1883, %v1962
  %v1964 = vpop.f32.mrb[0].mxu0
  %1965 = vdwg.mxu0
  %v1966 = vmax.f32 %v1958, 0.0
  %v1967 = vmax.f32 %v1963, 0.0
  %v1968 = vadd.f32 %v1574, %v1966
  %v1969 = vadd.f32 %v1575, %v1967
  %v1970 = vld [vmem:[%s57] sm:$0xff]
  %v1971 = vld [vmem:[%s57 + $0x8] sm:$0xff]
  %v1972 = vld [vmem:[%s57 + $0x10] sm:$0xff]
  %v1973 = vld [vmem:[%s57 + $0x18] sm:$0xff]
  %v1974 = vld [vmem:[%s59] sm:$0x1]
  %v1976 = vlaneseq
  %v1977 = vshrl.u32 %v1976, 7
  %v1978 = vsub.s32 0, %v1977
  %v1979 = vrot.slane %v1974, %v1978
  %v1982 = vsel %vm368, %v1968, 0
  %v1985 = vsel %vm368, %v1969, 0
  %1987 = vmatprep.subr.mxu0 0.0
  %1988 = vmatpush1.msra.mxu0 %v1970
  %1989 = vmatprep.subr.mxu0 0.0
  %1990 = vmatpush1.msra.mxu0 %v1971
  %1991 = vmatprep.subr.mxu0 0.0
  %1992 = vmatpush1.msra.mxu0 %v1972
  %1993 = vmatprep.subr.mxu0 0.0
  %1994 = vmatpush1.msra.mxu0 %v1973
  %1995 = vmatprep.subr.mxu0 0.0
  %1996 = vmatpush1.msra.mxu0 0.0
  %1997 = vmatprep.subr.mxu0 0.0
  %1998 = vmatpush1.msra.mxu0 0.0
  %1999 = vmatprep.subr.mxu0 0.0
  %2000 = vmatpush1.msra.mxu0 0.0
  %2001 = vmatprep.subr.mxu0 0.0
  %2002 = vmatpush1.msra.mxu0 0.0
  %2003 = vmatprep.subr.mxu0 0.0
  %2004 = vmatpush1.msra.mxu0 0.0
  %2005 = vmatprep.subr.mxu0 0.0
  %2006 = vmatpush1.msra.mxu0 0.0
  %2007 = vmatprep.subr.mxu0 0.0
  %2008 = vmatpush1.msra.mxu0 0.0
  %2009 = vmatprep.subr.mxu0 0.0
  %2010 = vmatpush1.msra.mxu0 0.0
  %2011 = vmatprep.subr.mxu0 0.0
  %2012 = vmatpush1.msra.mxu0 0.0
  %2013 = vmatprep.subr.mxu0 0.0
  %2014 = vmatpush1.msra.mxu0 0.0
  %2015 = vmatprep.subr.mxu0 0.0
  %2016 = vmatpush1.msra.mxu0 0.0
  %2017 = vmatprep.subr.mxu0 0.0
  %2018 = vmatpush1.msra.mxu0 0.0
  %2019 = vmatprep.subr.mxu0 0.0
  %2020 = vmatpush1.msra.mxu0 0.0
  %2021 = vmatprep.subr.mxu0 0.0
  %2022 = vmatpush1.msra.mxu0 0.0
  %2023 = vmatprep.subr.mxu0 0.0
  %2024 = vmatpush1.msra.mxu0 0.0
  %2025 = vmatprep.subr.mxu0 0.0
  %2026 = vmatpush1.msra.mxu0 0.0
  %2027 = vmatprep.subr.mxu0 0.0
  %2028 = vmatpush1.msra.mxu0 0.0
  %2029 = vmatprep.subr.mxu0 0.0
  %2030 = vmatpush1.msra.mxu0 0.0
  %2031 = vmatprep.subr.mxu0 0.0
  %2032 = vmatpush1.msra.mxu0 0.0
  %2033 = vmatprep.subr.mxu0 0.0
  %2034 = vmatpush1.msra.mxu0 0.0
  %2035 = vmatprep.subr.mxu0 0.0
  %2036 = vmatpush1.msra.mxu0 0.0
  %2037 = vmatprep.subr.mxu0 0.0
  %2038 = vmatpush1.msra.mxu0 0.0
  %2039 = vmatprep.subr.mxu0 0.0
  %2040 = vmatpush1.msra.mxu0 0.0
  %2041 = vmatprep.subr.mxu0 0.0
  %2042 = vmatpush1.msra.mxu0 0.0
  %2043 = vmatprep.subr.mxu0 0.0
  %2044 = vmatpush1.msra.mxu0 0.0
  %2045 = vmatprep.subr.mxu0 0.0
  %2046 = vmatpush1.msra.mxu0 0.0
  %2047 = vmatprep.subr.mxu0 0.0
  %2048 = vmatpush1.msra.mxu0 0.0
  %2049 = vmatprep.subr.mxu0 0.0
  %2050 = vmatpush1.msra.mxu0 0.0
  %2051 = vmatprep.mubr.f32.mxu0 0.0
  %2052 = vmatmul.mubr.f32.gmra.mrb[0].mxu0 %v1982
  %v2053 = vpop.f32.mrb[0].mxu0
  %v2054 = vadd.f32 %v1979, %v2053
  %v2055 = vpop.f32.mrb[0].mxu0
  %2056 = vmatprep.mubr.f32.mxu0 0.0
  %2057 = vmatmul.mubr.f32.gmra.mrb[0].mxu0 %v1985
  %v2058 = vpop.f32.mrb[0].mxu0
  %v2059 = vadd.f32 %v1979, %v2058
  %v2060 = vpop.f32.mrb[0].mxu0
  %2061 = vdwg.mxu0
  %vm2062 = vcmask 15360
  %2063 = vst.msk [vmem:[%s61] sm:$0xff] %vm2062, %v2054
  %2064 = vst.msk [vmem:[%s61 + $0x8] sm:$0xff] %vm2062, %v2059
  // Predicated region
  $region122: #{tpu_custom_call.1} parent=0 // pred_check
    _
  $region123: #{tpu_custom_call.1} parent=0 // pred_check_branch
    %2066 = sbr.rel (0) target = $region125
  $region124: #{tpu_custom_call.1} parent=0 // pred_region
    _
  $region125: #{tpu_custom_call.1} parent=0 // pred_fallthru
    _
  // Predicated region
  $region126: #{tpu_custom_call.1} parent=0 // pred_check
    _
  $region127: #{tpu_custom_call.1} parent=0 // pred_check_branch
    %2068 = sbr.rel (0) target = $region129
  $region128: #{tpu_custom_call.1} parent=0 // pred_region
    _
  $region129: #{tpu_custom_call.1} parent=0 // pred_fallthru
    _

</llo_original>
